<compile_context>
chip_gen: v5e
topology: v5e:2x2
jax: 0.10.0
libtpu: 0.0.40
codegen_flags: <defaults>
</compile_context>

<pallas_src>
import jax
import jax.numpy as jnp
from jax.experimental import pallas as pl
from jax.experimental.pallas import tpu as pltpu

# Model dims (CartPole-v1: obs dim 4, 2 actions)
OBS_DIM = 4
FC1_DIMS = 1024
FC2_DIMS = 512
ACTION_SPACE = 2
HEAD_DIMS = ACTION_SPACE + 1  # fused [advantage | value] head


def network_kernel(x_ref, w1_ref, b1_ref, w2_ref, b2_ref, wh_ref, bh_ref, out_ref):
    # x_ref block is (1, B, OBS_DIM): one timestep's batch.
    x = x_ref[0]              # (B, OBS_DIM) f32
    w1 = w1_ref[...]          # (OBS_DIM, FC1_DIMS) f32

    # ---- fc1 + ReLU: K=4 contraction -> 4 rank-1 VPU updates (an MXU dot
    # would pad the contraction axis 4 -> 128).
    h1 = x[:, 0:1] * w1[0:1, :]
    for k in range(1, OBS_DIM):            # static unroll (4 iters)
        h1 = h1 + x[:, k:k + 1] * w1[k:k + 1, :]
    h1 = jnp.maximum(h1 + b1_ref[...], 0.0)          # (B, FC1_DIMS) f32

    # ---- fc2 + ReLU: bf16 operands into the MXU, f32 accumulation + epilogue
    h2 = jnp.dot(h1.astype(jnp.bfloat16), w2_ref[...],
                 preferred_element_type=jnp.float32) + b2_ref[...]
    h2 = jnp.maximum(h2, 0.0)                         # (B, FC2_DIMS) f32

    # ---- fused advantage|value head.  wh is stored transposed (3, FC2_DIMS),
    # contract the last axes of both operands (MXU trans_b matmul).
    y = jax.lax.dot_general(
        h2.astype(jnp.bfloat16), wh_ref[...],
        dimension_numbers=(((1,), (1,)), ((), ())),
        preferred_element_type=jnp.float32) + bh_ref[...]   # (B, 3) f32
    adv = y[:, :ACTION_SPACE]                         # (B, 2)
    val = y[:, ACTION_SPACE:HEAD_DIMS]                # (B, 1)

    # PyTorch `advantage.mean()` with no dim => scalar mean over ALL elements
    # of this forward's batch.
    adv_mean = jnp.mean(adv)
    out_ref[0] = val + adv - adv_mean                 # (B, 2)


def _build_pallas_call(T, B):
    const2 = lambda t: (0, 0)   # weights: same block every grid step -> resident in VMEM
    in_specs = [
        pl.BlockSpec((1, B, OBS_DIM), lambda t: (t, 0, 0)),    # x  (per-step)
        pl.BlockSpec((OBS_DIM, FC1_DIMS), const2),             # w1 f32
        pl.BlockSpec((1, FC1_DIMS), const2),                   # b1 f32
        pl.BlockSpec((FC1_DIMS, FC2_DIMS), const2),            # w2 bf16
        pl.BlockSpec((1, FC2_DIMS), const2),                   # b2 f32
        pl.BlockSpec((HEAD_DIMS, FC2_DIMS), const2),           # wh bf16 (transposed)
        pl.BlockSpec((1, HEAD_DIMS), const2),                  # bh f32
    ]
    out_specs = pl.BlockSpec((1, B, ACTION_SPACE), lambda t: (t, 0, 0))
    return pl.pallas_call(
        network_kernel,
        out_shape=jax.ShapeDtypeStruct((T, B, ACTION_SPACE), jnp.float32),
        grid=(T,),
        in_specs=in_specs,
        out_specs=out_specs,
        compiler_params=pltpu.CompilerParams(
            # Timesteps are independent forwards -> megacore-parallel on v7x.
            dimension_semantics=("parallel",)),
    )


def dueling_network_forward_steps(x_steps, params):
    """T independent forwards in one kernel launch. x_steps: (T, B, OBS_DIM)."""
    T, B, _ = x_steps.shape
    (w1, b1, w2, b2, wh, bh) = params
    return _build_pallas_call(T, B)(x_steps, w1, b1, w2, b2, wh, bh)


def dueling_network_forward(x, params):
    """Single forward, matching PyTorch Network.forward: (B, OBS_DIM) -> (B, 2)."""
    return dueling_network_forward_steps(x[None], params)[0]


def init_params(key):
    """Deterministic init mimicking nn.Linear default (uniform +-1/sqrt(fan_in)).

    Weights are stored as (in, out) so the kernel computes y = x @ W + b,
    except the fused head weight which is stored transposed (HEAD_DIMS, FC2_DIMS)
    for a contiguous DMA and a small padded VMEM tile.  w2 and wh are bf16
    (halves the dominant DMA); biases stay f32.
    """
    def linear(key, fan_in, fan_out):
        kw, kb = jax.random.split(key)
        bound = 1.0 / jnp.sqrt(jnp.float32(fan_in))
        w = jax.random.uniform(kw, (fan_in, fan_out), jnp.float32, -bound, bound)
        b = jax.random.uniform(kb, (1, fan_out), jnp.float32, -bound, bound)
        return w, b

    k1, k2, k3, k4 = jax.random.split(key, 4)
    w1, b1 = linear(k1, OBS_DIM, FC1_DIMS)
    w2, b2 = linear(k2, FC1_DIMS, FC2_DIMS)
    wa, ba = linear(k3, FC2_DIMS, ACTION_SPACE)
    wv, bv = linear(k4, FC2_DIMS, 1)

    # Fuse the two heads host-side and transpose: wh = [wa | wv]^T -> (3, FC2_DIMS)
    wh = jnp.concatenate([wa, wv], axis=1).T
    bh = jnp.concatenate([ba, bv], axis=1)            # (1, 3)

    w2 = w2.astype(jnp.bfloat16)
    wh = wh.astype(jnp.bfloat16)
    return (w1, b1, w2, b2, wh, bh)


def reference_forward(x, params):
    """Pure-JAX reference mirroring the kernel's numerics (bf16-weight dots,
    f32 accumulation and f32 epilogue)."""
    (w1, b1, w2, b2, wh, bh) = params
    h1 = jnp.maximum(
        jnp.dot(x, w1, precision=jax.lax.Precision.HIGHEST) + b1, 0.0)
    h2 = jnp.maximum(
        jnp.dot(h1.astype(jnp.bfloat16), w2,
                preferred_element_type=jnp.float32) + b2, 0.0)
    y = jax.lax.dot_general(
        h2.astype(jnp.bfloat16), wh,
        dimension_numbers=(((1,), (1,)), ((), ())),
        preferred_element_type=jnp.float32) + bh
    adv = y[:, :ACTION_SPACE]
    val = y[:, ACTION_SPACE:HEAD_DIMS]
    return val + adv - jnp.mean(adv)


if __name__ == "__main__":
    key = jax.random.PRNGKey(0)
    kx, kp = jax.random.split(key)
    params = init_params(kp)

    # ---- single forward (the original Network.forward semantics)
    batch = 8
    x = jax.random.normal(kx, (batch, OBS_DIM), jnp.float32)
    out = jax.block_until_ready(dueling_network_forward(x, params))
    ref = reference_forward(x, params)
    assert out.shape == (batch, ACTION_SPACE)
    assert jnp.allclose(out, ref, atol=2e-3, rtol=2e-3), (
        f"single-step max abs err {jnp.max(jnp.abs(out - ref))}")

    # ---- weight-resident multi-step path: T forwards, one kernel launch
    T = 4
    xs = jax.random.normal(jax.random.PRNGKey(1), (T, batch, OBS_DIM), jnp.float32)
    outs = jax.block_until_ready(dueling_network_forward_steps(xs, params))
    refs = jnp.stack([reference_forward(xs[t], params) for t in range(T)])
    assert outs.shape == (T, batch, ACTION_SPACE)
    assert jnp.allclose(outs, refs, atol=2e-3, rtol=2e-3), (
        f"multi-step max abs err {jnp.max(jnp.abs(outs - refs))}")

    print("KERNEL_OK")
</pallas_src>

<mosaic_0001>
module attributes {stable_mosaic.version = 11 : i64} {
  func.func @network_kernel(%arg0: i32, %arg1: memref<1x8x4xf32, #tpu.memory_space<vmem>>, %arg2: memref<4x1024xf32, #tpu.memory_space<vmem>>, %arg3: memref<1x1024xf32, #tpu.memory_space<vmem>>, %arg4: memref<1024x512xbf16, #tpu.memory_space<vmem>>, %arg5: memref<1x512xf32, #tpu.memory_space<vmem>>, %arg6: memref<3x512xbf16, #tpu.memory_space<vmem>>, %arg7: memref<1x3xf32, #tpu.memory_space<vmem>>, %arg8: memref<1x8x2xf32, #tpu.memory_space<vmem>>) attributes {dimension_semantics = [#tpu.dimension_semantics<parallel>], iteration_bounds = array<i64: 1>, scalar_prefetch = 0 : i64, scratch_operands = 0 : i64, tpu.core_type = #tpu.core_type<tc>, window_params = [{transform_indices = @transform_0, window_bounds = array<i64: 1, 8, 4>}, {pipeline_mode = #tpu.pipeline_mode<synchronous>, transform_indices = @transform_1, window_bounds = array<i64: 4, 1024>}, {pipeline_mode = #tpu.pipeline_mode<synchronous>, transform_indices = @transform_2, window_bounds = array<i64: 1, 1024>}, {pipeline_mode = #tpu.pipeline_mode<synchronous>, transform_indices = @transform_3, window_bounds = array<i64: 1024, 512>}, {pipeline_mode = #tpu.pipeline_mode<synchronous>, transform_indices = @transform_4, window_bounds = array<i64: 1, 512>}, {pipeline_mode = #tpu.pipeline_mode<synchronous>, transform_indices = @transform_5, window_bounds = array<i64: 3, 512>}, {pipeline_mode = #tpu.pipeline_mode<synchronous>, transform_indices = @transform_6, window_bounds = array<i64: 1, 3>}, {transform_indices = @transform_7, window_bounds = array<i64: 1, 8, 2>}]} {
    %c0 = arith.constant 0 : index
    %c0_0 = arith.constant 0 : index
    %c0_1 = arith.constant 0 : index
    %0 = vector.load %arg1[%c0, %c0_0, %c0_1] : memref<1x8x4xf32, #tpu.memory_space<vmem>>, vector<1x8x4xf32>
    %1 = vector.shape_cast %0 : vector<1x8x4xf32> to vector<8x4xf32>
    %c0_2 = arith.constant 0 : index
    %c0_3 = arith.constant 0 : index
    %2 = vector.load %arg2[%c0_2, %c0_3] : memref<4x1024xf32, #tpu.memory_space<vmem>>, vector<4x1024xf32>
    %3 = vector.extract_strided_slice %1 {offsets = [0, 0], sizes = [8, 1], strides = [1, 1]} : vector<8x4xf32> to vector<8x1xf32>
    %4 = vector.extract_strided_slice %2 {offsets = [0, 0], sizes = [1, 1024], strides = [1, 1]} : vector<4x1024xf32> to vector<1x1024xf32>
    %5 = vector.broadcast %3 : vector<8x1xf32> to vector<8x1024xf32>
    %6 = vector.broadcast %4 : vector<1x1024xf32> to vector<8x1024xf32>
    %7 = arith.mulf %5, %6 : vector<8x1024xf32>
    %8 = vector.extract_strided_slice %1 {offsets = [0, 1], sizes = [8, 1], strides = [1, 1]} : vector<8x4xf32> to vector<8x1xf32>
    %9 = vector.extract_strided_slice %2 {offsets = [1, 0], sizes = [1, 1024], strides = [1, 1]} : vector<4x1024xf32> to vector<1x1024xf32>
    %10 = vector.broadcast %8 : vector<8x1xf32> to vector<8x1024xf32>
    %11 = vector.broadcast %9 : vector<1x1024xf32> to vector<8x1024xf32>
    %12 = arith.mulf %10, %11 : vector<8x1024xf32>
    %13 = arith.addf %7, %12 : vector<8x1024xf32>
    %14 = vector.extract_strided_slice %1 {offsets = [0, 2], sizes = [8, 1], strides = [1, 1]} : vector<8x4xf32> to vector<8x1xf32>
    %15 = vector.extract_strided_slice %2 {offsets = [2, 0], sizes = [1, 1024], strides = [1, 1]} : vector<4x1024xf32> to vector<1x1024xf32>
    %16 = vector.broadcast %14 : vector<8x1xf32> to vector<8x1024xf32>
    %17 = vector.broadcast %15 : vector<1x1024xf32> to vector<8x1024xf32>
    %18 = arith.mulf %16, %17 : vector<8x1024xf32>
    %19 = arith.addf %13, %18 : vector<8x1024xf32>
    %20 = vector.extract_strided_slice %1 {offsets = [0, 3], sizes = [8, 1], strides = [1, 1]} : vector<8x4xf32> to vector<8x1xf32>
    %21 = vector.extract_strided_slice %2 {offsets = [3, 0], sizes = [1, 1024], strides = [1, 1]} : vector<4x1024xf32> to vector<1x1024xf32>
    %22 = vector.broadcast %20 : vector<8x1xf32> to vector<8x1024xf32>
    %23 = vector.broadcast %21 : vector<1x1024xf32> to vector<8x1024xf32>
    %24 = arith.mulf %22, %23 : vector<8x1024xf32>
    %25 = arith.addf %19, %24 : vector<8x1024xf32>
    %c0_4 = arith.constant 0 : index
    %c0_5 = arith.constant 0 : index
    %26 = vector.load %arg3[%c0_4, %c0_5] : memref<1x1024xf32, #tpu.memory_space<vmem>>, vector<1x1024xf32>
    %27 = vector.broadcast %26 : vector<1x1024xf32> to vector<8x1024xf32>
    %28 = arith.addf %25, %27 : vector<8x1024xf32>
    %cst = arith.constant 0.000000e+00 : f32
    %29 = vector.broadcast %cst : f32 to vector<8x1024xf32>
    %30 = arith.maximumf %28, %29 : vector<8x1024xf32>
    %31 = arith.truncf %30 : vector<8x1024xf32> to vector<8x1024xbf16>
    %c0_6 = arith.constant 0 : index
    %c0_7 = arith.constant 0 : index
    %32 = vector.load %arg4[%c0_6, %c0_7] : memref<1024x512xbf16, #tpu.memory_space<vmem>>, vector<1024x512xbf16>
    %cst_8 = arith.constant dense<0.000000e+00> : vector<8x512xf32>
    %33 = tpu.matmul %31, %32, %cst_8 {dimension_numbers = #tpu.dot_dimension_numbers<[1], [0], [0], [1], [0, 0, 1, 1], [], []>} : vector<8x1024xbf16>, vector<1024x512xbf16>, vector<8x512xf32> -> vector<8x512xf32>
    %c0_9 = arith.constant 0 : index
    %c0_10 = arith.constant 0 : index
    %34 = vector.load %arg5[%c0_9, %c0_10] : memref<1x512xf32, #tpu.memory_space<vmem>>, vector<1x512xf32>
    %35 = vector.broadcast %34 : vector<1x512xf32> to vector<8x512xf32>
    %36 = arith.addf %33, %35 : vector<8x512xf32>
    %cst_11 = arith.constant 0.000000e+00 : f32
    %37 = vector.broadcast %cst_11 : f32 to vector<8x512xf32>
    %38 = arith.maximumf %36, %37 : vector<8x512xf32>
    %39 = arith.truncf %38 : vector<8x512xf32> to vector<8x512xbf16>
    %c0_12 = arith.constant 0 : index
    %c0_13 = arith.constant 0 : index
    %40 = vector.load %arg6[%c0_12, %c0_13] : memref<3x512xbf16, #tpu.memory_space<vmem>>, vector<3x512xbf16>
    %cst_14 = arith.constant dense<0.000000e+00> : vector<8x3xf32>
    %41 = tpu.matmul %39, %40, %cst_14 {dimension_numbers = #tpu.dot_dimension_numbers<[1], [1], [0], [0], [0, 0, 1, 0], [], []>} : vector<8x512xbf16>, vector<3x512xbf16>, vector<8x3xf32> -> vector<8x3xf32>
    %c0_15 = arith.constant 0 : index
    %c0_16 = arith.constant 0 : index
    %42 = vector.load %arg7[%c0_15, %c0_16] : memref<1x3xf32, #tpu.memory_space<vmem>>, vector<1x3xf32>
    %43 = vector.broadcast %42 : vector<1x3xf32> to vector<8x3xf32>
    %44 = arith.addf %41, %43 : vector<8x3xf32>
    %45 = vector.extract_strided_slice %44 {offsets = [0, 0], sizes = [8, 2], strides = [1, 1]} : vector<8x3xf32> to vector<8x2xf32>
    %46 = vector.extract_strided_slice %44 {offsets = [0, 2], sizes = [8, 1], strides = [1, 1]} : vector<8x3xf32> to vector<8x1xf32>
    %47 = vector.shape_cast %45 : vector<8x2xf32> to vector<1x8x2xf32>
    %cst_17 = arith.constant dense<0.000000e+00> : vector<1xf32>
    %48 = vector.multi_reduction <add>, %47, %cst_17 [1, 2] : vector<1x8x2xf32> to vector<1xf32>
    %49 = vector.shape_cast %48 : vector<1xf32> to vector<1x1x1xf32>
    %50 = vector.extract %49[0, 0, 0] : f32 from vector<1x1x1xf32>
    %cst_18 = arith.constant 1.600000e+01 : f32
    %51 = arith.divf %50, %cst_18 : f32
    %52 = vector.broadcast %46 : vector<8x1xf32> to vector<8x2xf32>
    %53 = arith.addf %52, %45 : vector<8x2xf32>
    %54 = vector.broadcast %51 : f32 to vector<8x2xf32>
    %55 = arith.subf %53, %54 : vector<8x2xf32>
    %c0_19 = arith.constant 0 : index
    %c0_20 = arith.constant 0 : index
    %c0_21 = arith.constant 0 : index
    %56 = vector.load %arg8[%c0_19, %c0_20, %c0_21] : memref<1x8x2xf32, #tpu.memory_space<vmem>>, vector<1x8x2xf32>
    %57 = vector.shape_cast %56 : vector<1x8x2xf32> to vector<8x2xf32>
    %58 = vector.shape_cast %55 : vector<8x2xf32> to vector<1x8x2xf32>
    tpu.vector_store %arg8[%c0_19, %c0_20, %c0_21], %58 {strides = array<i32>} : memref<1x8x2xf32, #tpu.memory_space<vmem>>, vector<1x8x2xf32>,
    return
  }
  func.func @transform_0(%arg0: i32) -> (i32, i32, i32) {
    %c0_i32 = arith.constant 0 : i32
    %c0_i32_0 = arith.constant 0 : i32
    %c0_i32_1 = arith.constant 0 : i32
    return %arg0, %c0_i32, %c0_i32_0 : i32, i32, i32
  }
  func.func @transform_1(%arg0: i32) -> (i32, i32) {
    %c0_i32 = arith.constant 0 : i32
    %c0_i32_0 = arith.constant 0 : i32
    %c0_i32_1 = arith.constant 0 : i32
    return %c0_i32, %c0_i32_0 : i32, i32
  }
  func.func @transform_2(%arg0: i32) -> (i32, i32) {
    %c0_i32 = arith.constant 0 : i32
    %c0_i32_0 = arith.constant 0 : i32
    %c0_i32_1 = arith.constant 0 : i32
    return %c0_i32, %c0_i32_0 : i32, i32
  }
  func.func @transform_3(%arg0: i32) -> (i32, i32) {
    %c0_i32 = arith.constant 0 : i32
    %c0_i32_0 = arith.constant 0 : i32
    %c0_i32_1 = arith.constant 0 : i32
    return %c0_i32, %c0_i32_0 : i32, i32
  }
  func.func @transform_4(%arg0: i32) -> (i32, i32) {
    %c0_i32 = arith.constant 0 : i32
    %c0_i32_0 = arith.constant 0 : i32
    %c0_i32_1 = arith.constant 0 : i32
    return %c0_i32, %c0_i32_0 : i32, i32
  }
  func.func @transform_5(%arg0: i32) -> (i32, i32) {
    %c0_i32 = arith.constant 0 : i32
    %c0_i32_0 = arith.constant 0 : i32
    %c0_i32_1 = arith.constant 0 : i32
    return %c0_i32, %c0_i32_0 : i32, i32
  }
  func.func @transform_6(%arg0: i32) -> (i32, i32) {
    %c0_i32 = arith.constant 0 : i32
    %c0_i32_0 = arith.constant 0 : i32
    %c0_i32_1 = arith.constant 0 : i32
    return %c0_i32, %c0_i32_0 : i32, i32
  }
  func.func @transform_7(%arg0: i32) -> (i32, i32, i32) {
    %c0_i32 = arith.constant 0 : i32
    %c0_i32_0 = arith.constant 0 : i32
    %c0_i32_1 = arith.constant 0 : i32
    return %arg0, %c0_i32, %c0_i32_0 : i32, i32, i32
  }
}

</mosaic_0001>

<llo_original>
// kernel: tpu_custom_call.1
$region0: #{tpu_custom_call.1}
  #allocation0 [shape = 'u32[]', space=smem, size = 0x4, offset = 0x4, fixed_abs, tag = 'smem constant byte address 0x4 - core index']
  #allocation1 [shape = 'u32[72,128]{1,0:T(1,128)}', space=vmem, size = 0x9000, scoped, tag = 'internal scratch']
  %s0 = inlined_call_operand.vmem [shape: f32[1,8,4], index: 0, kind: input, shape index: {}]
  %s1 = inlined_call_operand.hbm [shape: f32[4,1024], index: 1, kind: input, shape index: {}]
  %s2 = inlined_call_operand.vmem [shape: f32[1,1024], index: 2, kind: input, shape index: {}]
  %s3 = inlined_call_operand.hbm [shape: bf16[1024,512], index: 3, kind: input, shape index: {}]
  %s4 = inlined_call_operand.hbm [shape: f32[1,512], index: 4, kind: input, shape index: {}]
  %s5 = inlined_call_operand.vmem [shape: bf16[3,512], index: 5, kind: input, shape index: {}]
  %s6 = inlined_call_operand.vmem [shape: f32[1,3], index: 6, kind: input, shape index: {}]
  %s7 = inlined_call_operand.vmem [shape: f32[1,8,2], index: 7, kind: output, shape index: {}]
  %s8 = sld [smem:[#allocation0]]
  $region50: #{tpu_custom_call.1} parent=0
    _
  %s10 = ssub.s32 1, %s8
  %s11 = scalar_select 0, %s10, %s8
  $region1: #{tpu_custom_call.1} parent=0
    #allocation2 [shape = 'u8[16384]{0}', space=vmem, size = 0x4000, scoped, tag = 'input window, operand 1, single buffered']
    #allocation3 [shape = 's32[1]{0}', space=sflag, size = 0x4, scoped, tag = 'scoped memory for tpu_custom_call.1']
    #allocation4 [shape = 'u8[1048576]{0}', space=vmem, size = 0x100000, scoped, tag = 'input window, operand 3, single buffered']
    #allocation5 [shape = 's32[1]{0}', space=sflag, size = 0x4, scoped, tag = 'scoped memory for tpu_custom_call.1']
    #allocation6 [shape = 'u8[2048]{0}', space=vmem, size = 0x800, scoped, tag = 'input window, operand 4, single buffered']
    %12 = vsyncpa [#allocation3], 0
    %13 = vsyncpa [#allocation5], 0
    // Predicated region
    $region2: #{tpu_custom_call.1} parent=1 // pred_check
      _
    $region3: #{tpu_custom_call.1} parent=1 // pred_check_branch
      %15 = sbr.rel (0) target = $region5
    $region4: #{tpu_custom_call.1} parent=1 // pred_region
      _
    $region5: #{tpu_custom_call.1} parent=1 // pred_fallthru
      _
    // Predicated region
    $region6: #{tpu_custom_call.1} parent=1 // pred_check
      _
    $region7: #{tpu_custom_call.1} parent=1 // pred_check_branch
      %17 = sbr.rel (0) target = $region9
    $region8: #{tpu_custom_call.1} parent=1 // pred_region
      %19 = vsyncadd [#allocation3], 0
      %s21 = sshll.u32 %s1, 4
      %s22 = int_to_ptr.hbm [resolvable:$true] %s21
      %s23 = sshll.u32 [#allocation2], 4
      %s24 = int_to_ptr.vmem [resolvable:$true] %s23
      %26 = dma.hbm_to_vmem [thread:$0]  %s22, 512, %s24, [#allocation3]
    $region9: #{tpu_custom_call.1} parent=1 // pred_fallthru
      _
    // Predicated region
    $region10: #{tpu_custom_call.1} parent=1 // pred_check
      _
    $region11: #{tpu_custom_call.1} parent=1 // pred_check_branch
      %28 = sbr.rel (0) target = $region13
    $region12: #{tpu_custom_call.1} parent=1 // pred_region
      _
    $region13: #{tpu_custom_call.1} parent=1 // pred_fallthru
      _
    // Predicated region
    $region14: #{tpu_custom_call.1} parent=1 // pred_check
      _
    $region15: #{tpu_custom_call.1} parent=1 // pred_check_branch
      %30 = sbr.rel (0) target = $region17
    $region16: #{tpu_custom_call.1} parent=1 // pred_region
      %32 = vsyncadd [#allocation5], 0
      %s33 = sshll.u32 %s3, 4
      %s34 = int_to_ptr.hbm [resolvable:$true] %s33
      %s35 = sshll.u32 [#allocation4], 4
      %s36 = int_to_ptr.vmem [resolvable:$true] %s35
      %41 = dma.hbm_to_vmem [thread:$0]  %s34, 32768, %s36, [#allocation5], 256, 256, 16
    $region17: #{tpu_custom_call.1} parent=1 // pred_fallthru
      _
    // Predicated region
    $region18: #{tpu_custom_call.1} parent=1 // pred_check
      _
    $region19: #{tpu_custom_call.1} parent=1 // pred_check_branch
      %43 = sbr.rel (0) target = $region21
    $region20: #{tpu_custom_call.1} parent=1 // pred_region
      %45 = vsyncadd [#allocation5], 0
      %s47 = sshll.u32 %s4, 4
      %s48 = int_to_ptr.hbm [resolvable:$true] %s47
      %s49 = sshll.u32 [#allocation6], 4
      %s50 = int_to_ptr.vmem [resolvable:$true] %s49
      %52 = dma.hbm_to_vmem [thread:$0]  %s48, 64, %s50, [#allocation5]
    $region21: #{tpu_custom_call.1} parent=1 // pred_fallthru
      _
    // Predicated region
    $region22: #{tpu_custom_call.1} parent=1 // pred_check
      _
    $region23: #{tpu_custom_call.1} parent=1 // pred_check_branch
      %54 = sbr.rel (0) target = $region25
    $region24: #{tpu_custom_call.1} parent=1 // pred_region
      _
    $region25: #{tpu_custom_call.1} parent=1 // pred_fallthru
      _
    // Predicated region
    $region26: #{tpu_custom_call.1} parent=1 // pred_check
      _
    $region27: #{tpu_custom_call.1} parent=1 // pred_check_branch
      %56 = sbr.rel (0) target = $region29
    $region28: #{tpu_custom_call.1} parent=1 // pred_region
      _
    $region29: #{tpu_custom_call.1} parent=1 // pred_fallthru
      _
    // Predicated region
    $region30: #{tpu_custom_call.1} parent=1 // pred_check
      _
    $region31: #{tpu_custom_call.1} parent=1 // pred_check_branch
      %58 = sbr.rel (0) target = $region33
    $region32: #{tpu_custom_call.1} parent=1 // pred_region
      %60 = dma.done [#allocation3], 512
    $region33: #{tpu_custom_call.1} parent=1 // pred_fallthru
      _
    // Predicated region
    $region34: #{tpu_custom_call.1} parent=1 // pred_check
      _
    $region35: #{tpu_custom_call.1} parent=1 // pred_check_branch
      %62 = sbr.rel (0) target = $region37
    $region36: #{tpu_custom_call.1} parent=1 // pred_region
      %64 = dma.done [#allocation5], 32768
    $region37: #{tpu_custom_call.1} parent=1 // pred_fallthru
      _
    // Predicated region
    $region38: #{tpu_custom_call.1} parent=1 // pred_check
      _
    $region39: #{tpu_custom_call.1} parent=1 // pred_check_branch
      %66 = sbr.rel (0) target = $region41
    $region40: #{tpu_custom_call.1} parent=1 // pred_region
      %68 = dma.done [#allocation5], 64
    $region41: #{tpu_custom_call.1} parent=1 // pred_fallthru
      _
    %v70 = vld [vmem:[%s0] sm:$0xff]
    %v71 = vld [vmem:[#allocation2] sm:$0xff]
    %v72 = vld [vmem:[#allocation2 + $0x8] sm:$0xff]
    %v73 = vld [vmem:[#allocation2 + $0x10] sm:$0xff]
    %v74 = vld [vmem:[#allocation2 + $0x18] sm:$0xff]
    %76 = vset.pattern.permute.xlu0 0
    %77 = vperm.xlu0 %76, %v70
    %v78 = vpop.permute.xlu0 %77
    %v84 = vperm.slane %v71, 0
    %v85 = vperm.slane %v71, 4
    %v86 = vperm.slane %v72, 0
    %v87 = vperm.slane %v72, 4
    %v88 = vperm.slane %v73, 0
    %v89 = vperm.slane %v73, 4
    %v90 = vperm.slane %v74, 0
    %v91 = vperm.slane %v74, 4
    %v100 = vperm.slane %v84, 0
    %v101 = vperm.slane %v85, 0
    %v102 = vperm.slane %v86, 0
    %v103 = vperm.slane %v87, 0
    %v104 = vperm.slane %v88, 0
    %v105 = vperm.slane %v89, 0
    %v106 = vperm.slane %v90, 0
    %v107 = vperm.slane %v91, 0
    %v108 = vmul.f32 %v78, %v100
    %v109 = vmul.f32 %v78, %v101
    %v110 = vmul.f32 %v78, %v102
    %v111 = vmul.f32 %v78, %v103
    %v112 = vmul.f32 %v78, %v104
    %v113 = vmul.f32 %v78, %v105
    %v114 = vmul.f32 %v78, %v106
    %v115 = vmul.f32 %v78, %v107
    %116 = vset.pattern.permute.xlu0 1
    %117 = vperm.xlu0 %116, %v70
    %v118 = vpop.permute.xlu0 %117
    %v120 = vperm.slane %v71, 1
    %v121 = vperm.slane %v71, 5
    %v122 = vperm.slane %v72, 1
    %v123 = vperm.slane %v72, 5
    %v124 = vperm.slane %v73, 1
    %v125 = vperm.slane %v73, 5
    %v126 = vperm.slane %v74, 1
    %v127 = vperm.slane %v74, 5
    %v136 = vperm.slane %v120, 1
    %v137 = vperm.slane %v121, 1
    %v138 = vperm.slane %v122, 1
    %v139 = vperm.slane %v123, 1
    %v140 = vperm.slane %v124, 1
    %v141 = vperm.slane %v125, 1
    %v142 = vperm.slane %v126, 1
    %v143 = vperm.slane %v127, 1
    %v144 = vmul.f32 %v118, %v136
    %v145 = vmul.f32 %v118, %v137
    %v146 = vmul.f32 %v118, %v138
    %v147 = vmul.f32 %v118, %v139
    %v148 = vmul.f32 %v118, %v140
    %v149 = vmul.f32 %v118, %v141
    %v150 = vmul.f32 %v118, %v142
    %v151 = vmul.f32 %v118, %v143
    %v152 = vadd.f32 %v108, %v144
    %v153 = vadd.f32 %v109, %v145
    %v154 = vadd.f32 %v110, %v146
    %v155 = vadd.f32 %v111, %v147
    %v156 = vadd.f32 %v112, %v148
    %v157 = vadd.f32 %v113, %v149
    %v158 = vadd.f32 %v114, %v150
    %v159 = vadd.f32 %v115, %v151
    %160 = vset.pattern.permute.xlu0 2
    %161 = vperm.xlu0 %160, %v70
    %v162 = vpop.permute.xlu0 %161
    %v164 = vperm.slane %v71, 2
    %v165 = vperm.slane %v71, 6
    %v166 = vperm.slane %v72, 2
    %v167 = vperm.slane %v72, 6
    %v168 = vperm.slane %v73, 2
    %v169 = vperm.slane %v73, 6
    %v170 = vperm.slane %v74, 2
    %v171 = vperm.slane %v74, 6
    %v180 = vperm.slane %v164, 2
    %v181 = vperm.slane %v165, 2
    %v182 = vperm.slane %v166, 2
    %v183 = vperm.slane %v167, 2
    %v184 = vperm.slane %v168, 2
    %v185 = vperm.slane %v169, 2
    %v186 = vperm.slane %v170, 2
    %v187 = vperm.slane %v171, 2
    %v188 = vmul.f32 %v162, %v180
    %v189 = vmul.f32 %v162, %v181
    %v190 = vmul.f32 %v162, %v182
    %v191 = vmul.f32 %v162, %v183
    %v192 = vmul.f32 %v162, %v184
    %v193 = vmul.f32 %v162, %v185
    %v194 = vmul.f32 %v162, %v186
    %v195 = vmul.f32 %v162, %v187
    %v196 = vadd.f32 %v152, %v188
    %v197 = vadd.f32 %v153, %v189
    %v198 = vadd.f32 %v154, %v190
    %v199 = vadd.f32 %v155, %v191
    %v200 = vadd.f32 %v156, %v192
    %v201 = vadd.f32 %v157, %v193
    %v202 = vadd.f32 %v158, %v194
    %v203 = vadd.f32 %v159, %v195
    %204 = vset.pattern.permute.xlu0 3
    %205 = vperm.xlu0 %204, %v70
    %v206 = vpop.permute.xlu0 %205
    %v208 = vperm.slane %v71, 3
    %v209 = vperm.slane %v71, 7
    %v210 = vperm.slane %v72, 3
    %v211 = vperm.slane %v72, 7
    %v212 = vperm.slane %v73, 3
    %v213 = vperm.slane %v73, 7
    %v214 = vperm.slane %v74, 3
    %v215 = vperm.slane %v74, 7
    %v224 = vperm.slane %v208, 3
    %v225 = vperm.slane %v209, 3
    %v226 = vperm.slane %v210, 3
    %v227 = vperm.slane %v211, 3
    %v228 = vperm.slane %v212, 3
    %v229 = vperm.slane %v213, 3
    %v230 = vperm.slane %v214, 3
    %v231 = vperm.slane %v215, 3
    %v232 = vmul.f32 %v206, %v224
    %v233 = vmul.f32 %v206, %v225
    %v234 = vmul.f32 %v206, %v226
    %v235 = vmul.f32 %v206, %v227
    %v236 = vmul.f32 %v206, %v228
    %v237 = vmul.f32 %v206, %v229
    %v238 = vmul.f32 %v206, %v230
    %v239 = vmul.f32 %v206, %v231
    %v240 = vadd.f32 %v196, %v232
    %v241 = vadd.f32 %v197, %v233
    %v242 = vadd.f32 %v198, %v234
    %v243 = vadd.f32 %v199, %v235
    %v244 = vadd.f32 %v200, %v236
    %v245 = vadd.f32 %v201, %v237
    %v246 = vadd.f32 %v202, %v238
    %v247 = vadd.f32 %v203, %v239
    %v248 = vld [vmem:[%s2] sm:$0xff]
    %v250 = vperm.slane %v248, 0
    %v251 = vperm.slane %v248, 1
    %v252 = vperm.slane %v248, 2
    %v253 = vperm.slane %v248, 3
    %v254 = vperm.slane %v248, 4
    %v255 = vperm.slane %v248, 5
    %v256 = vperm.slane %v248, 6
    %v257 = vperm.slane %v248, 7
    %v266 = vadd.f32 %v240, %v250
    %v267 = vadd.f32 %v241, %v251
    %v268 = vadd.f32 %v242, %v252
    %v269 = vadd.f32 %v243, %v253
    %v270 = vadd.f32 %v244, %v254
    %v271 = vadd.f32 %v245, %v255
    %v272 = vadd.f32 %v246, %v256
    %v273 = vadd.f32 %v247, %v257
    %v274 = vmax.f32 %v266, 0.0
    %v275 = vmax.f32 %v267, 0.0
    %v276 = vmax.f32 %v268, 0.0
    %v277 = vmax.f32 %v269, 0.0
    %v278 = vmax.f32 %v270, 0.0
    %v279 = vmax.f32 %v271, 0.0
    %v280 = vmax.f32 %v272, 0.0
    %v281 = vmax.f32 %v273, 0.0
    %v282 = vpack.c.bf16 %v274, %v274
    %v283 = vpack.c.bf16 %v275, %v275
    %v284 = vpack.c.bf16 %v276, %v276
    %v285 = vpack.c.bf16 %v277, %v277
    %v286 = vpack.c.bf16 %v278, %v278
    %v287 = vpack.c.bf16 %v279, %v279
    %v288 = vpack.c.bf16 %v280, %v280
    %v289 = vpack.c.bf16 %v281, %v281
    %v290 = vld [vmem:[#allocation4] sm:$0xff]
    %v291 = vld [vmem:[#allocation4 + $0x8] sm:$0xff]
    %v292 = vld [vmem:[#allocation4 + $0x10] sm:$0xff]
    %v293 = vld [vmem:[#allocation4 + $0x18] sm:$0xff]
    %v294 = vld [vmem:[#allocation4 + $0x20] sm:$0xff]
    %v295 = vld [vmem:[#allocation4 + $0x28] sm:$0xff]
    %v296 = vld [vmem:[#allocation4 + $0x30] sm:$0xff]
    %v297 = vld [vmem:[#allocation4 + $0x38] sm:$0xff]
    %v298 = vld [vmem:[#allocation4 + $0x40] sm:$0xff]
    %v299 = vld [vmem:[#allocation4 + $0x48] sm:$0xff]
    %v300 = vld [vmem:[#allocation4 + $0x50] sm:$0xff]
    %v301 = vld [vmem:[#allocation4 + $0x58] sm:$0xff]
    %v302 = vld [vmem:[#allocation4 + $0x60] sm:$0xff]
    %v303 = vld [vmem:[#allocation4 + $0x68] sm:$0xff]
    %v304 = vld [vmem:[#allocation4 + $0x70] sm:$0xff]
    %v305 = vld [vmem:[#allocation4 + $0x78] sm:$0xff]
    %v306 = vld [vmem:[#allocation4 + $0x80] sm:$0xff]
    %v307 = vld [vmem:[#allocation4 + $0x88] sm:$0xff]
    %v308 = vld [vmem:[#allocation4 + $0x90] sm:$0xff]
    %v309 = vld [vmem:[#allocation4 + $0x98] sm:$0xff]
    %v310 = vld [vmem:[#allocation4 + $0xa0] sm:$0xff]
    %v311 = vld [vmem:[#allocation4 + $0xa8] sm:$0xff]
    %v312 = vld [vmem:[#allocation4 + $0xb0] sm:$0xff]
    %v313 = vld [vmem:[#allocation4 + $0xb8] sm:$0xff]
    %v314 = vld [vmem:[#allocation4 + $0xc0] sm:$0xff]
    %v315 = vld [vmem:[#allocation4 + $0xc8] sm:$0xff]
    %v316 = vld [vmem:[#allocation4 + $0xd0] sm:$0xff]
    %v317 = vld [vmem:[#allocation4 + $0xd8] sm:$0xff]
    %v318 = vld [vmem:[#allocation4 + $0xe0] sm:$0xff]
    %v319 = vld [vmem:[#allocation4 + $0xe8] sm:$0xff]
    %v320 = vld [vmem:[#allocation4 + $0xf0] sm:$0xff]
    %v321 = vld [vmem:[#allocation4 + $0xf8] sm:$0xff]
    %v322 = vld [vmem:[#allocation4 + $0x100] sm:$0xff]
    %v323 = vld [vmem:[#allocation4 + $0x108] sm:$0xff]
    %v324 = vld [vmem:[#allocation4 + $0x110] sm:$0xff]
    %v325 = vld [vmem:[#allocation4 + $0x118] sm:$0xff]
    %v326 = vld [vmem:[#allocation4 + $0x120] sm:$0xff]
    %v327 = vld [vmem:[#allocation4 + $0x128] sm:$0xff]
    %v328 = vld [vmem:[#allocation4 + $0x130] sm:$0xff]
    %v329 = vld [vmem:[#allocation4 + $0x138] sm:$0xff]
    %v330 = vld [vmem:[#allocation4 + $0x140] sm:$0xff]
    %v331 = vld [vmem:[#allocation4 + $0x148] sm:$0xff]
    %v332 = vld [vmem:[#allocation4 + $0x150] sm:$0xff]
    %v333 = vld [vmem:[#allocation4 + $0x158] sm:$0xff]
    %v334 = vld [vmem:[#allocation4 + $0x160] sm:$0xff]
    %v335 = vld [vmem:[#allocation4 + $0x168] sm:$0xff]
    %v336 = vld [vmem:[#allocation4 + $0x170] sm:$0xff]
    %v337 = vld [vmem:[#allocation4 + $0x178] sm:$0xff]
    %v338 = vld [vmem:[#allocation4 + $0x180] sm:$0xff]
    %v339 = vld [vmem:[#allocation4 + $0x188] sm:$0xff]
    %v340 = vld [vmem:[#allocation4 + $0x190] sm:$0xff]
    %v341 = vld [vmem:[#allocation4 + $0x198] sm:$0xff]
    %v342 = vld [vmem:[#allocation4 + $0x1a0] sm:$0xff]
    %v343 = vld [vmem:[#allocation4 + $0x1a8] sm:$0xff]
    %v344 = vld [vmem:[#allocation4 + $0x1b0] sm:$0xff]
    %v345 = vld [vmem:[#allocation4 + $0x1b8] sm:$0xff]
    %v346 = vld [vmem:[#allocation4 + $0x1c0] sm:$0xff]
    %v347 = vld [vmem:[#allocation4 + $0x1c8] sm:$0xff]
    %v348 = vld [vmem:[#allocation4 + $0x1d0] sm:$0xff]
    %v349 = vld [vmem:[#allocation4 + $0x1d8] sm:$0xff]
    %v350 = vld [vmem:[#allocation4 + $0x1e0] sm:$0xff]
    %v351 = vld [vmem:[#allocation4 + $0x1e8] sm:$0xff]
    %v352 = vld [vmem:[#allocation4 + $0x1f0] sm:$0xff]
    %v353 = vld [vmem:[#allocation4 + $0x1f8] sm:$0xff]
    %v354 = vld [vmem:[#allocation4 + $0x200] sm:$0xff]
    %v355 = vld [vmem:[#allocation4 + $0x208] sm:$0xff]
    %v356 = vld [vmem:[#allocation4 + $0x210] sm:$0xff]
    %v357 = vld [vmem:[#allocation4 + $0x218] sm:$0xff]
    %v358 = vld [vmem:[#allocation4 + $0x220] sm:$0xff]
    %v359 = vld [vmem:[#allocation4 + $0x228] sm:$0xff]
    %v360 = vld [vmem:[#allocation4 + $0x230] sm:$0xff]
    %v361 = vld [vmem:[#allocation4 + $0x238] sm:$0xff]
    %v362 = vld [vmem:[#allocation4 + $0x240] sm:$0xff]
    %v363 = vld [vmem:[#allocation4 + $0x248] sm:$0xff]
    %v364 = vld [vmem:[#allocation4 + $0x250] sm:$0xff]
    %v365 = vld [vmem:[#allocation4 + $0x258] sm:$0xff]
    %v366 = vld [vmem:[#allocation4 + $0x260] sm:$0xff]
    %v367 = vld [vmem:[#allocation4 + $0x268] sm:$0xff]
    %v368 = vld [vmem:[#allocation4 + $0x270] sm:$0xff]
    %v369 = vld [vmem:[#allocation4 + $0x278] sm:$0xff]
    %v370 = vld [vmem:[#allocation4 + $0x280] sm:$0xff]
    %v371 = vld [vmem:[#allocation4 + $0x288] sm:$0xff]
    %v372 = vld [vmem:[#allocation4 + $0x290] sm:$0xff]
    %v373 = vld [vmem:[#allocation4 + $0x298] sm:$0xff]
    %v374 = vld [vmem:[#allocation4 + $0x2a0] sm:$0xff]
    %v375 = vld [vmem:[#allocation4 + $0x2a8] sm:$0xff]
    %v376 = vld [vmem:[#allocation4 + $0x2b0] sm:$0xff]
    %v377 = vld [vmem:[#allocation4 + $0x2b8] sm:$0xff]
    %v378 = vld [vmem:[#allocation4 + $0x2c0] sm:$0xff]
    %v379 = vld [vmem:[#allocation4 + $0x2c8] sm:$0xff]
    %v380 = vld [vmem:[#allocation4 + $0x2d0] sm:$0xff]
    %v381 = vld [vmem:[#allocation4 + $0x2d8] sm:$0xff]
    %v382 = vld [vmem:[#allocation4 + $0x2e0] sm:$0xff]
    %v383 = vld [vmem:[#allocation4 + $0x2e8] sm:$0xff]
    %v384 = vld [vmem:[#allocation4 + $0x2f0] sm:$0xff]
    %v385 = vld [vmem:[#allocation4 + $0x2f8] sm:$0xff]
    %v386 = vld [vmem:[#allocation4 + $0x300] sm:$0xff]
    %v387 = vld [vmem:[#allocation4 + $0x308] sm:$0xff]
    %v388 = vld [vmem:[#allocation4 + $0x310] sm:$0xff]
    %v389 = vld [vmem:[#allocation4 + $0x318] sm:$0xff]
    %v390 = vld [vmem:[#allocation4 + $0x320] sm:$0xff]
    %v391 = vld [vmem:[#allocation4 + $0x328] sm:$0xff]
    %v392 = vld [vmem:[#allocation4 + $0x330] sm:$0xff]
    %v393 = vld [vmem:[#allocation4 + $0x338] sm:$0xff]
    %v394 = vld [vmem:[#allocation4 + $0x340] sm:$0xff]
    %v395 = vld [vmem:[#allocation4 + $0x348] sm:$0xff]
    %v396 = vld [vmem:[#allocation4 + $0x350] sm:$0xff]
    %v397 = vld [vmem:[#allocation4 + $0x358] sm:$0xff]
    %v398 = vld [vmem:[#allocation4 + $0x360] sm:$0xff]
    %v399 = vld [vmem:[#allocation4 + $0x368] sm:$0xff]
    %v400 = vld [vmem:[#allocation4 + $0x370] sm:$0xff]
    %v401 = vld [vmem:[#allocation4 + $0x378] sm:$0xff]
    %v402 = vld [vmem:[#allocation4 + $0x380] sm:$0xff]
    %v403 = vld [vmem:[#allocation4 + $0x388] sm:$0xff]
    %v404 = vld [vmem:[#allocation4 + $0x390] sm:$0xff]
    %v405 = vld [vmem:[#allocation4 + $0x398] sm:$0xff]
    %v406 = vld [vmem:[#allocation4 + $0x3a0] sm:$0xff]
    %v407 = vld [vmem:[#allocation4 + $0x3a8] sm:$0xff]
    %v408 = vld [vmem:[#allocation4 + $0x3b0] sm:$0xff]
    %v409 = vld [vmem:[#allocation4 + $0x3b8] sm:$0xff]
    %v410 = vld [vmem:[#allocation4 + $0x3c0] sm:$0xff]
    %v411 = vld [vmem:[#allocation4 + $0x3c8] sm:$0xff]
    %v412 = vld [vmem:[#allocation4 + $0x3d0] sm:$0xff]
    %v413 = vld [vmem:[#allocation4 + $0x3d8] sm:$0xff]
    %v414 = vld [vmem:[#allocation4 + $0x3e0] sm:$0xff]
    %v415 = vld [vmem:[#allocation4 + $0x3e8] sm:$0xff]
    %v416 = vld [vmem:[#allocation4 + $0x3f0] sm:$0xff]
    %v417 = vld [vmem:[#allocation4 + $0x3f8] sm:$0xff]
    %v418 = vld [vmem:[#allocation4 + $0x400] sm:$0xff]
    %v419 = vld [vmem:[#allocation4 + $0x408] sm:$0xff]
    %v420 = vld [vmem:[#allocation4 + $0x410] sm:$0xff]
    %v421 = vld [vmem:[#allocation4 + $0x418] sm:$0xff]
    %v422 = vld [vmem:[#allocation4 + $0x420] sm:$0xff]
    %v423 = vld [vmem:[#allocation4 + $0x428] sm:$0xff]
    %v424 = vld [vmem:[#allocation4 + $0x430] sm:$0xff]
    %v425 = vld [vmem:[#allocation4 + $0x438] sm:$0xff]
    %v426 = vld [vmem:[#allocation4 + $0x440] sm:$0xff]
    %v427 = vld [vmem:[#allocation4 + $0x448] sm:$0xff]
    %v428 = vld [vmem:[#allocation4 + $0x450] sm:$0xff]
    %v429 = vld [vmem:[#allocation4 + $0x458] sm:$0xff]
    %v430 = vld [vmem:[#allocation4 + $0x460] sm:$0xff]
    %v431 = vld [vmem:[#allocation4 + $0x468] sm:$0xff]
    %v432 = vld [vmem:[#allocation4 + $0x470] sm:$0xff]
    %v433 = vld [vmem:[#allocation4 + $0x478] sm:$0xff]
    %v434 = vld [vmem:[#allocation4 + $0x480] sm:$0xff]
    %v435 = vld [vmem:[#allocation4 + $0x488] sm:$0xff]
    %v436 = vld [vmem:[#allocation4 + $0x490] sm:$0xff]
    %v437 = vld [vmem:[#allocation4 + $0x498] sm:$0xff]
    %v438 = vld [vmem:[#allocation4 + $0x4a0] sm:$0xff]
    %v439 = vld [vmem:[#allocation4 + $0x4a8] sm:$0xff]
    %v440 = vld [vmem:[#allocation4 + $0x4b0] sm:$0xff]
    %v441 = vld [vmem:[#allocation4 + $0x4b8] sm:$0xff]
    %v442 = vld [vmem:[#allocation4 + $0x4c0] sm:$0xff]
    %v443 = vld [vmem:[#allocation4 + $0x4c8] sm:$0xff]
    %v444 = vld [vmem:[#allocation4 + $0x4d0] sm:$0xff]
    %v445 = vld [vmem:[#allocation4 + $0x4d8] sm:$0xff]
    %v446 = vld [vmem:[#allocation4 + $0x4e0] sm:$0xff]
    %v447 = vld [vmem:[#allocation4 + $0x4e8] sm:$0xff]
    %v448 = vld [vmem:[#allocation4 + $0x4f0] sm:$0xff]
    %v449 = vld [vmem:[#allocation4 + $0x4f8] sm:$0xff]
    %v450 = vld [vmem:[#allocation4 + $0x500] sm:$0xff]
    %v451 = vld [vmem:[#allocation4 + $0x508] sm:$0xff]
    %v452 = vld [vmem:[#allocation4 + $0x510] sm:$0xff]
    %v453 = vld [vmem:[#allocation4 + $0x518] sm:$0xff]
    %v454 = vld [vmem:[#allocation4 + $0x520] sm:$0xff]
    %v455 = vld [vmem:[#allocation4 + $0x528] sm:$0xff]
    %v456 = vld [vmem:[#allocation4 + $0x530] sm:$0xff]
    %v457 = vld [vmem:[#allocation4 + $0x538] sm:$0xff]
    %v458 = vld [vmem:[#allocation4 + $0x540] sm:$0xff]
    %v459 = vld [vmem:[#allocation4 + $0x548] sm:$0xff]
    %v460 = vld [vmem:[#allocation4 + $0x550] sm:$0xff]
    %v461 = vld [vmem:[#allocation4 + $0x558] sm:$0xff]
    %v462 = vld [vmem:[#allocation4 + $0x560] sm:$0xff]
    %v463 = vld [vmem:[#allocation4 + $0x568] sm:$0xff]
    %v464 = vld [vmem:[#allocation4 + $0x570] sm:$0xff]
    %v465 = vld [vmem:[#allocation4 + $0x578] sm:$0xff]
    %v466 = vld [vmem:[#allocation4 + $0x580] sm:$0xff]
    %v467 = vld [vmem:[#allocation4 + $0x588] sm:$0xff]
    %v468 = vld [vmem:[#allocation4 + $0x590] sm:$0xff]
    %v469 = vld [vmem:[#allocation4 + $0x598] sm:$0xff]
    %v470 = vld [vmem:[#allocation4 + $0x5a0] sm:$0xff]
    %v471 = vld [vmem:[#allocation4 + $0x5a8] sm:$0xff]
    %v472 = vld [vmem:[#allocation4 + $0x5b0] sm:$0xff]
    %v473 = vld [vmem:[#allocation4 + $0x5b8] sm:$0xff]
    %v474 = vld [vmem:[#allocation4 + $0x5c0] sm:$0xff]
    %v475 = vld [vmem:[#allocation4 + $0x5c8] sm:$0xff]
    %v476 = vld [vmem:[#allocation4 + $0x5d0] sm:$0xff]
    %v477 = vld [vmem:[#allocation4 + $0x5d8] sm:$0xff]
    %v478 = vld [vmem:[#allocation4 + $0x5e0] sm:$0xff]
    %v479 = vld [vmem:[#allocation4 + $0x5e8] sm:$0xff]
    %v480 = vld [vmem:[#allocation4 + $0x5f0] sm:$0xff]
    %v481 = vld [vmem:[#allocation4 + $0x5f8] sm:$0xff]
    %v482 = vld [vmem:[#allocation4 + $0x600] sm:$0xff]
    %v483 = vld [vmem:[#allocation4 + $0x608] sm:$0xff]
    %v484 = vld [vmem:[#allocation4 + $0x610] sm:$0xff]
    %v485 = vld [vmem:[#allocation4 + $0x618] sm:$0xff]
    %v486 = vld [vmem:[#allocation4 + $0x620] sm:$0xff]
    %v487 = vld [vmem:[#allocation4 + $0x628] sm:$0xff]
    %v488 = vld [vmem:[#allocation4 + $0x630] sm:$0xff]
    %v489 = vld [vmem:[#allocation4 + $0x638] sm:$0xff]
    %v490 = vld [vmem:[#allocation4 + $0x640] sm:$0xff]
    %v491 = vld [vmem:[#allocation4 + $0x648] sm:$0xff]
    %v492 = vld [vmem:[#allocation4 + $0x650] sm:$0xff]
    %v493 = vld [vmem:[#allocation4 + $0x658] sm:$0xff]
    %v494 = vld [vmem:[#allocation4 + $0x660] sm:$0xff]
    %v495 = vld [vmem:[#allocation4 + $0x668] sm:$0xff]
    %v496 = vld [vmem:[#allocation4 + $0x670] sm:$0xff]
    %v497 = vld [vmem:[#allocation4 + $0x678] sm:$0xff]
    %v498 = vld [vmem:[#allocation4 + $0x680] sm:$0xff]
    %v499 = vld [vmem:[#allocation4 + $0x688] sm:$0xff]
    %v500 = vld [vmem:[#allocation4 + $0x690] sm:$0xff]
    %v501 = vld [vmem:[#allocation4 + $0x698] sm:$0xff]
    %v502 = vld [vmem:[#allocation4 + $0x6a0] sm:$0xff]
    %v503 = vld [vmem:[#allocation4 + $0x6a8] sm:$0xff]
    %v504 = vld [vmem:[#allocation4 + $0x6b0] sm:$0xff]
    %v505 = vld [vmem:[#allocation4 + $0x6b8] sm:$0xff]
    %v506 = vld [vmem:[#allocation4 + $0x6c0] sm:$0xff]
    %v507 = vld [vmem:[#allocation4 + $0x6c8] sm:$0xff]
    %v508 = vld [vmem:[#allocation4 + $0x6d0] sm:$0xff]
    %v509 = vld [vmem:[#allocation4 + $0x6d8] sm:$0xff]
    %v510 = vld [vmem:[#allocation4 + $0x6e0] sm:$0xff]
    %v511 = vld [vmem:[#allocation4 + $0x6e8] sm:$0xff]
    %v512 = vld [vmem:[#allocation4 + $0x6f0] sm:$0xff]
    %v513 = vld [vmem:[#allocation4 + $0x6f8] sm:$0xff]
    %v514 = vld [vmem:[#allocation4 + $0x700] sm:$0xff]
    %v515 = vld [vmem:[#allocation4 + $0x708] sm:$0xff]
    %v516 = vld [vmem:[#allocation4 + $0x710] sm:$0xff]
    %v517 = vld [vmem:[#allocation4 + $0x718] sm:$0xff]
    %v518 = vld [vmem:[#allocation4 + $0x720] sm:$0xff]
    %v519 = vld [vmem:[#allocation4 + $0x728] sm:$0xff]
    %v520 = vld [vmem:[#allocation4 + $0x730] sm:$0xff]
    %v521 = vld [vmem:[#allocation4 + $0x738] sm:$0xff]
    %v522 = vld [vmem:[#allocation4 + $0x740] sm:$0xff]
    %v523 = vld [vmem:[#allocation4 + $0x748] sm:$0xff]
    %v524 = vld [vmem:[#allocation4 + $0x750] sm:$0xff]
    %v525 = vld [vmem:[#allocation4 + $0x758] sm:$0xff]
    %v526 = vld [vmem:[#allocation4 + $0x760] sm:$0xff]
    %v527 = vld [vmem:[#allocation4 + $0x768] sm:$0xff]
    %v528 = vld [vmem:[#allocation4 + $0x770] sm:$0xff]
    %v529 = vld [vmem:[#allocation4 + $0x778] sm:$0xff]
    %v530 = vld [vmem:[#allocation4 + $0x780] sm:$0xff]
    %v531 = vld [vmem:[#allocation4 + $0x788] sm:$0xff]
    %v532 = vld [vmem:[#allocation4 + $0x790] sm:$0xff]
    %v533 = vld [vmem:[#allocation4 + $0x798] sm:$0xff]
    %v534 = vld [vmem:[#allocation4 + $0x7a0] sm:$0xff]
    %v535 = vld [vmem:[#allocation4 + $0x7a8] sm:$0xff]
    %v536 = vld [vmem:[#allocation4 + $0x7b0] sm:$0xff]
    %v537 = vld [vmem:[#allocation4 + $0x7b8] sm:$0xff]
    %v538 = vld [vmem:[#allocation4 + $0x7c0] sm:$0xff]
    %v539 = vld [vmem:[#allocation4 + $0x7c8] sm:$0xff]
    %v540 = vld [vmem:[#allocation4 + $0x7d0] sm:$0xff]
    %v541 = vld [vmem:[#allocation4 + $0x7d8] sm:$0xff]
    %v542 = vld [vmem:[#allocation4 + $0x7e0] sm:$0xff]
    %v543 = vld [vmem:[#allocation4 + $0x7e8] sm:$0xff]
    %v544 = vld [vmem:[#allocation4 + $0x7f0] sm:$0xff]
    %v545 = vld [vmem:[#allocation4 + $0x7f8] sm:$0xff]
    %v546 = vld [vmem:[#allocation6] sm:$0xf]
    %v548 = vperm.slane %v546, 0
    %v549 = vperm.slane %v546, 1
    %v550 = vperm.slane %v546, 2
    %v551 = vperm.slane %v546, 3
    %v812 = vunpack.c.l.b16 %v290
    %v813 = vunpack.c.h.b16 %v290
    %v814 = vunpack.c.l.b16 %v291
    %v815 = vunpack.c.h.b16 %v291
    %v816 = vunpack.c.l.b16 %v292
    %v817 = vunpack.c.h.b16 %v292
    %v818 = vunpack.c.l.b16 %v293
    %v819 = vunpack.c.h.b16 %v293
    %v820 = vunpack.c.l.b16 %v294
    %v821 = vunpack.c.h.b16 %v294
    %v822 = vunpack.c.l.b16 %v295
    %v823 = vunpack.c.h.b16 %v295
    %v824 = vunpack.c.l.b16 %v296
    %v825 = vunpack.c.h.b16 %v296
    %v826 = vunpack.c.l.b16 %v297
    %v827 = vunpack.c.h.b16 %v297
    %v828 = vunpack.c.l.b16 %v298
    %v829 = vunpack.c.h.b16 %v298
    %v830 = vunpack.c.l.b16 %v299
    %v831 = vunpack.c.h.b16 %v299
    %v832 = vunpack.c.l.b16 %v300
    %v833 = vunpack.c.h.b16 %v300
    %v834 = vunpack.c.l.b16 %v301
    %v835 = vunpack.c.h.b16 %v301
    %v836 = vunpack.c.l.b16 %v302
    %v837 = vunpack.c.h.b16 %v302
    %v838 = vunpack.c.l.b16 %v303
    %v839 = vunpack.c.h.b16 %v303
    %v840 = vunpack.c.l.b16 %v304
    %v841 = vunpack.c.h.b16 %v304
    %v842 = vunpack.c.l.b16 %v305
    %v843 = vunpack.c.h.b16 %v305
    %v844 = vunpack.c.l.b16 %v306
    %v845 = vunpack.c.h.b16 %v306
    %v846 = vunpack.c.l.b16 %v307
    %v847 = vunpack.c.h.b16 %v307
    %v848 = vunpack.c.l.b16 %v308
    %v849 = vunpack.c.h.b16 %v308
    %v850 = vunpack.c.l.b16 %v309
    %v851 = vunpack.c.h.b16 %v309
    %v852 = vunpack.c.l.b16 %v310
    %v853 = vunpack.c.h.b16 %v310
    %v854 = vunpack.c.l.b16 %v311
    %v855 = vunpack.c.h.b16 %v311
    %v856 = vunpack.c.l.b16 %v312
    %v857 = vunpack.c.h.b16 %v312
    %v858 = vunpack.c.l.b16 %v313
    %v859 = vunpack.c.h.b16 %v313
    %v860 = vunpack.c.l.b16 %v314
    %v861 = vunpack.c.h.b16 %v314
    %v862 = vunpack.c.l.b16 %v315
    %v863 = vunpack.c.h.b16 %v315
    %v864 = vunpack.c.l.b16 %v316
    %v865 = vunpack.c.h.b16 %v316
    %v866 = vunpack.c.l.b16 %v317
    %v867 = vunpack.c.h.b16 %v317
    %v868 = vunpack.c.l.b16 %v318
    %v869 = vunpack.c.h.b16 %v318
    %v870 = vunpack.c.l.b16 %v319
    %v871 = vunpack.c.h.b16 %v319
    %v872 = vunpack.c.l.b16 %v320
    %v873 = vunpack.c.h.b16 %v320
    %v874 = vunpack.c.l.b16 %v321
    %v875 = vunpack.c.h.b16 %v321
    %v876 = vunpack.c.l.b16 %v322
    %v877 = vunpack.c.h.b16 %v322
    %v878 = vunpack.c.l.b16 %v323
    %v879 = vunpack.c.h.b16 %v323
    %v880 = vunpack.c.l.b16 %v324
    %v881 = vunpack.c.h.b16 %v324
    %v882 = vunpack.c.l.b16 %v325
    %v883 = vunpack.c.h.b16 %v325
    %v884 = vunpack.c.l.b16 %v326
    %v885 = vunpack.c.h.b16 %v326
    %v886 = vunpack.c.l.b16 %v327
    %v887 = vunpack.c.h.b16 %v327
    %v888 = vunpack.c.l.b16 %v328
    %v889 = vunpack.c.h.b16 %v328
    %v890 = vunpack.c.l.b16 %v329
    %v891 = vunpack.c.h.b16 %v329
    %v892 = vunpack.c.l.b16 %v330
    %v893 = vunpack.c.h.b16 %v330
    %v894 = vunpack.c.l.b16 %v331
    %v895 = vunpack.c.h.b16 %v331
    %v896 = vunpack.c.l.b16 %v332
    %v897 = vunpack.c.h.b16 %v332
    %v898 = vunpack.c.l.b16 %v333
    %v899 = vunpack.c.h.b16 %v333
    %v900 = vunpack.c.l.b16 %v334
    %v901 = vunpack.c.h.b16 %v334
    %v902 = vunpack.c.l.b16 %v335
    %v903 = vunpack.c.h.b16 %v335
    %v904 = vunpack.c.l.b16 %v336
    %v905 = vunpack.c.h.b16 %v336
    %v906 = vunpack.c.l.b16 %v337
    %v907 = vunpack.c.h.b16 %v337
    %v908 = vunpack.c.l.b16 %v338
    %v909 = vunpack.c.h.b16 %v338
    %v910 = vunpack.c.l.b16 %v339
    %v911 = vunpack.c.h.b16 %v339
    %v912 = vunpack.c.l.b16 %v340
    %v913 = vunpack.c.h.b16 %v340
    %v914 = vunpack.c.l.b16 %v341
    %v915 = vunpack.c.h.b16 %v341
    %v916 = vunpack.c.l.b16 %v342
    %v917 = vunpack.c.h.b16 %v342
    %v918 = vunpack.c.l.b16 %v343
    %v919 = vunpack.c.h.b16 %v343
    %v920 = vunpack.c.l.b16 %v344
    %v921 = vunpack.c.h.b16 %v344
    %v922 = vunpack.c.l.b16 %v345
    %v923 = vunpack.c.h.b16 %v345
    %v924 = vunpack.c.l.b16 %v346
    %v925 = vunpack.c.h.b16 %v346
    %v926 = vunpack.c.l.b16 %v347
    %v927 = vunpack.c.h.b16 %v347
    %v928 = vunpack.c.l.b16 %v348
    %v929 = vunpack.c.h.b16 %v348
    %v930 = vunpack.c.l.b16 %v349
    %v931 = vunpack.c.h.b16 %v349
    %v932 = vunpack.c.l.b16 %v350
    %v933 = vunpack.c.h.b16 %v350
    %v934 = vunpack.c.l.b16 %v351
    %v935 = vunpack.c.h.b16 %v351
    %v936 = vunpack.c.l.b16 %v352
    %v937 = vunpack.c.h.b16 %v352
    %v938 = vunpack.c.l.b16 %v353
    %v939 = vunpack.c.h.b16 %v353
    %v940 = vunpack.c.l.b16 %v354
    %v941 = vunpack.c.h.b16 %v354
    %v942 = vunpack.c.l.b16 %v355
    %v943 = vunpack.c.h.b16 %v355
    %v944 = vunpack.c.l.b16 %v356
    %v945 = vunpack.c.h.b16 %v356
    %v946 = vunpack.c.l.b16 %v357
    %v947 = vunpack.c.h.b16 %v357
    %v948 = vunpack.c.l.b16 %v358
    %v949 = vunpack.c.h.b16 %v358
    %v950 = vunpack.c.l.b16 %v359
    %v951 = vunpack.c.h.b16 %v359
    %v952 = vunpack.c.l.b16 %v360
    %v953 = vunpack.c.h.b16 %v360
    %v954 = vunpack.c.l.b16 %v361
    %v955 = vunpack.c.h.b16 %v361
    %v956 = vunpack.c.l.b16 %v362
    %v957 = vunpack.c.h.b16 %v362
    %v958 = vunpack.c.l.b16 %v363
    %v959 = vunpack.c.h.b16 %v363
    %v960 = vunpack.c.l.b16 %v364
    %v961 = vunpack.c.h.b16 %v364
    %v962 = vunpack.c.l.b16 %v365
    %v963 = vunpack.c.h.b16 %v365
    %v964 = vunpack.c.l.b16 %v366
    %v965 = vunpack.c.h.b16 %v366
    %v966 = vunpack.c.l.b16 %v367
    %v967 = vunpack.c.h.b16 %v367
    %v968 = vunpack.c.l.b16 %v368
    %v969 = vunpack.c.h.b16 %v368
    %v970 = vunpack.c.l.b16 %v369
    %v971 = vunpack.c.h.b16 %v369
    %v972 = vunpack.c.l.b16 %v370
    %v973 = vunpack.c.h.b16 %v370
    %v974 = vunpack.c.l.b16 %v371
    %v975 = vunpack.c.h.b16 %v371
    %v976 = vunpack.c.l.b16 %v372
    %v977 = vunpack.c.h.b16 %v372
    %v978 = vunpack.c.l.b16 %v373
    %v979 = vunpack.c.h.b16 %v373
    %v980 = vunpack.c.l.b16 %v374
    %v981 = vunpack.c.h.b16 %v374
    %v982 = vunpack.c.l.b16 %v375
    %v983 = vunpack.c.h.b16 %v375
    %v984 = vunpack.c.l.b16 %v376
    %v985 = vunpack.c.h.b16 %v376
    %v986 = vunpack.c.l.b16 %v377
    %v987 = vunpack.c.h.b16 %v377
    %v988 = vunpack.c.l.b16 %v378
    %v989 = vunpack.c.h.b16 %v378
    %v990 = vunpack.c.l.b16 %v379
    %v991 = vunpack.c.h.b16 %v379
    %v992 = vunpack.c.l.b16 %v380
    %v993 = vunpack.c.h.b16 %v380
    %v994 = vunpack.c.l.b16 %v381
    %v995 = vunpack.c.h.b16 %v381
    %v996 = vunpack.c.l.b16 %v382
    %v997 = vunpack.c.h.b16 %v382
    %v998 = vunpack.c.l.b16 %v383
    %v999 = vunpack.c.h.b16 %v383
    %v1000 = vunpack.c.l.b16 %v384
    %v1001 = vunpack.c.h.b16 %v384
    %v1002 = vunpack.c.l.b16 %v385
    %v1003 = vunpack.c.h.b16 %v385
    %v1004 = vunpack.c.l.b16 %v386
    %v1005 = vunpack.c.h.b16 %v386
    %v1006 = vunpack.c.l.b16 %v387
    %v1007 = vunpack.c.h.b16 %v387
    %v1008 = vunpack.c.l.b16 %v388
    %v1009 = vunpack.c.h.b16 %v388
    %v1010 = vunpack.c.l.b16 %v389
    %v1011 = vunpack.c.h.b16 %v389
    %v1012 = vunpack.c.l.b16 %v390
    %v1013 = vunpack.c.h.b16 %v390
    %v1014 = vunpack.c.l.b16 %v391
    %v1015 = vunpack.c.h.b16 %v391
    %v1016 = vunpack.c.l.b16 %v392
    %v1017 = vunpack.c.h.b16 %v392
    %v1018 = vunpack.c.l.b16 %v393
    %v1019 = vunpack.c.h.b16 %v393
    %v1020 = vunpack.c.l.b16 %v394
    %v1021 = vunpack.c.h.b16 %v394
    %v1022 = vunpack.c.l.b16 %v395
    %v1023 = vunpack.c.h.b16 %v395
    %v1024 = vunpack.c.l.b16 %v396
    %v1025 = vunpack.c.h.b16 %v396
    %v1026 = vunpack.c.l.b16 %v397
    %v1027 = vunpack.c.h.b16 %v397
    %v1028 = vunpack.c.l.b16 %v398
    %v1029 = vunpack.c.h.b16 %v398
    %v1030 = vunpack.c.l.b16 %v399
    %v1031 = vunpack.c.h.b16 %v399
    %v1032 = vunpack.c.l.b16 %v400
    %v1033 = vunpack.c.h.b16 %v400
    %v1034 = vunpack.c.l.b16 %v401
    %v1035 = vunpack.c.h.b16 %v401
    %v1036 = vunpack.c.l.b16 %v402
    %v1037 = vunpack.c.h.b16 %v402
    %v1038 = vunpack.c.l.b16 %v403
    %v1039 = vunpack.c.h.b16 %v403
    %v1040 = vunpack.c.l.b16 %v404
    %v1041 = vunpack.c.h.b16 %v404
    %v1042 = vunpack.c.l.b16 %v405
    %v1043 = vunpack.c.h.b16 %v405
    %v1044 = vunpack.c.l.b16 %v406
    %v1045 = vunpack.c.h.b16 %v406
    %v1046 = vunpack.c.l.b16 %v407
    %v1047 = vunpack.c.h.b16 %v407
    %v1048 = vunpack.c.l.b16 %v408
    %v1049 = vunpack.c.h.b16 %v408
    %v1050 = vunpack.c.l.b16 %v409
    %v1051 = vunpack.c.h.b16 %v409
    %v1052 = vunpack.c.l.b16 %v410
    %v1053 = vunpack.c.h.b16 %v410
    %v1054 = vunpack.c.l.b16 %v411
    %v1055 = vunpack.c.h.b16 %v411
    %v1056 = vunpack.c.l.b16 %v412
    %v1057 = vunpack.c.h.b16 %v412
    %v1058 = vunpack.c.l.b16 %v413
    %v1059 = vunpack.c.h.b16 %v413
    %v1060 = vunpack.c.l.b16 %v414
    %v1061 = vunpack.c.h.b16 %v414
    %v1062 = vunpack.c.l.b16 %v415
    %v1063 = vunpack.c.h.b16 %v415
    %v1064 = vunpack.c.l.b16 %v416
    %v1065 = vunpack.c.h.b16 %v416
    %v1066 = vunpack.c.l.b16 %v417
    %v1067 = vunpack.c.h.b16 %v417
    %v1068 = vunpack.c.l.b16 %v418
    %v1069 = vunpack.c.h.b16 %v418
    %v1070 = vunpack.c.l.b16 %v419
    %v1071 = vunpack.c.h.b16 %v419
    %v1072 = vunpack.c.l.b16 %v420
    %v1073 = vunpack.c.h.b16 %v420
    %v1074 = vunpack.c.l.b16 %v421
    %v1075 = vunpack.c.h.b16 %v421
    %v1076 = vunpack.c.l.b16 %v422
    %v1077 = vunpack.c.h.b16 %v422
    %v1078 = vunpack.c.l.b16 %v423
    %v1079 = vunpack.c.h.b16 %v423
    %v1080 = vunpack.c.l.b16 %v424
    %v1081 = vunpack.c.h.b16 %v424
    %v1082 = vunpack.c.l.b16 %v425
    %v1083 = vunpack.c.h.b16 %v425
    %v1084 = vunpack.c.l.b16 %v426
    %v1085 = vunpack.c.h.b16 %v426
    %v1086 = vunpack.c.l.b16 %v427
    %v1087 = vunpack.c.h.b16 %v427
    %v1088 = vunpack.c.l.b16 %v428
    %v1089 = vunpack.c.h.b16 %v428
    %v1090 = vunpack.c.l.b16 %v429
    %v1091 = vunpack.c.h.b16 %v429
    %v1092 = vunpack.c.l.b16 %v430
    %v1093 = vunpack.c.h.b16 %v430
    %v1094 = vunpack.c.l.b16 %v431
    %v1095 = vunpack.c.h.b16 %v431
    %v1096 = vunpack.c.l.b16 %v432
    %v1097 = vunpack.c.h.b16 %v432
    %v1098 = vunpack.c.l.b16 %v433
    %v1099 = vunpack.c.h.b16 %v433
    %v1100 = vunpack.c.l.b16 %v434
    %v1101 = vunpack.c.h.b16 %v434
    %v1102 = vunpack.c.l.b16 %v435
    %v1103 = vunpack.c.h.b16 %v435
    %v1104 = vunpack.c.l.b16 %v436
    %v1105 = vunpack.c.h.b16 %v436
    %v1106 = vunpack.c.l.b16 %v437
    %v1107 = vunpack.c.h.b16 %v437
    %v1108 = vunpack.c.l.b16 %v438
    %v1109 = vunpack.c.h.b16 %v438
    %v1110 = vunpack.c.l.b16 %v439
    %v1111 = vunpack.c.h.b16 %v439
    %v1112 = vunpack.c.l.b16 %v440
    %v1113 = vunpack.c.h.b16 %v440
    %v1114 = vunpack.c.l.b16 %v441
    %v1115 = vunpack.c.h.b16 %v441
    %v1116 = vunpack.c.l.b16 %v442
    %v1117 = vunpack.c.h.b16 %v442
    %v1118 = vunpack.c.l.b16 %v443
    %v1119 = vunpack.c.h.b16 %v443
    %v1120 = vunpack.c.l.b16 %v444
    %v1121 = vunpack.c.h.b16 %v444
    %v1122 = vunpack.c.l.b16 %v445
    %v1123 = vunpack.c.h.b16 %v445
    %v1124 = vunpack.c.l.b16 %v446
    %v1125 = vunpack.c.h.b16 %v446
    %v1126 = vunpack.c.l.b16 %v447
    %v1127 = vunpack.c.h.b16 %v447
    %v1128 = vunpack.c.l.b16 %v448
    %v1129 = vunpack.c.h.b16 %v448
    %v1130 = vunpack.c.l.b16 %v449
    %v1131 = vunpack.c.h.b16 %v449
    %v1132 = vunpack.c.l.b16 %v450
    %v1133 = vunpack.c.h.b16 %v450
    %v1134 = vunpack.c.l.b16 %v451
    %v1135 = vunpack.c.h.b16 %v451
    %v1136 = vunpack.c.l.b16 %v452
    %v1137 = vunpack.c.h.b16 %v452
    %v1138 = vunpack.c.l.b16 %v453
    %v1139 = vunpack.c.h.b16 %v453
    %v1140 = vunpack.c.l.b16 %v454
    %v1141 = vunpack.c.h.b16 %v454
    %v1142 = vunpack.c.l.b16 %v455
    %v1143 = vunpack.c.h.b16 %v455
    %v1144 = vunpack.c.l.b16 %v456
    %v1145 = vunpack.c.h.b16 %v456
    %v1146 = vunpack.c.l.b16 %v457
    %v1147 = vunpack.c.h.b16 %v457
    %v1148 = vunpack.c.l.b16 %v458
    %v1149 = vunpack.c.h.b16 %v458
    %v1150 = vunpack.c.l.b16 %v459
    %v1151 = vunpack.c.h.b16 %v459
    %v1152 = vunpack.c.l.b16 %v460
    %v1153 = vunpack.c.h.b16 %v460
    %v1154 = vunpack.c.l.b16 %v461
    %v1155 = vunpack.c.h.b16 %v461
    %v1156 = vunpack.c.l.b16 %v462
    %v1157 = vunpack.c.h.b16 %v462
    %v1158 = vunpack.c.l.b16 %v463
    %v1159 = vunpack.c.h.b16 %v463
    %v1160 = vunpack.c.l.b16 %v464
    %v1161 = vunpack.c.h.b16 %v464
    %v1162 = vunpack.c.l.b16 %v465
    %v1163 = vunpack.c.h.b16 %v465
    %v1164 = vunpack.c.l.b16 %v466
    %v1165 = vunpack.c.h.b16 %v466
    %v1166 = vunpack.c.l.b16 %v467
    %v1167 = vunpack.c.h.b16 %v467
    %v1168 = vunpack.c.l.b16 %v468
    %v1169 = vunpack.c.h.b16 %v468
    %v1170 = vunpack.c.l.b16 %v469
    %v1171 = vunpack.c.h.b16 %v469
    %v1172 = vunpack.c.l.b16 %v470
    %v1173 = vunpack.c.h.b16 %v470
    %v1174 = vunpack.c.l.b16 %v471
    %v1175 = vunpack.c.h.b16 %v471
    %v1176 = vunpack.c.l.b16 %v472
    %v1177 = vunpack.c.h.b16 %v472
    %v1178 = vunpack.c.l.b16 %v473
    %v1179 = vunpack.c.h.b16 %v473
    %v1180 = vunpack.c.l.b16 %v474
    %v1181 = vunpack.c.h.b16 %v474
    %v1182 = vunpack.c.l.b16 %v475
    %v1183 = vunpack.c.h.b16 %v475
    %v1184 = vunpack.c.l.b16 %v476
    %v1185 = vunpack.c.h.b16 %v476
    %v1186 = vunpack.c.l.b16 %v477
    %v1187 = vunpack.c.h.b16 %v477
    %v1188 = vunpack.c.l.b16 %v478
    %v1189 = vunpack.c.h.b16 %v478
    %v1190 = vunpack.c.l.b16 %v479
    %v1191 = vunpack.c.h.b16 %v479
    %v1192 = vunpack.c.l.b16 %v480
    %v1193 = vunpack.c.h.b16 %v480
    %v1194 = vunpack.c.l.b16 %v481
    %v1195 = vunpack.c.h.b16 %v481
    %v1196 = vunpack.c.l.b16 %v482
    %v1197 = vunpack.c.h.b16 %v482
    %v1198 = vunpack.c.l.b16 %v483
    %v1199 = vunpack.c.h.b16 %v483
    %v1200 = vunpack.c.l.b16 %v484
    %v1201 = vunpack.c.h.b16 %v484
    %v1202 = vunpack.c.l.b16 %v485
    %v1203 = vunpack.c.h.b16 %v485
    %v1204 = vunpack.c.l.b16 %v486
    %v1205 = vunpack.c.h.b16 %v486
    %v1206 = vunpack.c.l.b16 %v487
    %v1207 = vunpack.c.h.b16 %v487
    %v1208 = vunpack.c.l.b16 %v488
    %v1209 = vunpack.c.h.b16 %v488
    %v1210 = vunpack.c.l.b16 %v489
    %v1211 = vunpack.c.h.b16 %v489
    %v1212 = vunpack.c.l.b16 %v490
    %v1213 = vunpack.c.h.b16 %v490
    %v1214 = vunpack.c.l.b16 %v491
    %v1215 = vunpack.c.h.b16 %v491
    %v1216 = vunpack.c.l.b16 %v492
    %v1217 = vunpack.c.h.b16 %v492
    %v1218 = vunpack.c.l.b16 %v493
    %v1219 = vunpack.c.h.b16 %v493
    %v1220 = vunpack.c.l.b16 %v494
    %v1221 = vunpack.c.h.b16 %v494
    %v1222 = vunpack.c.l.b16 %v495
    %v1223 = vunpack.c.h.b16 %v495
    %v1224 = vunpack.c.l.b16 %v496
    %v1225 = vunpack.c.h.b16 %v496
    %v1226 = vunpack.c.l.b16 %v497
    %v1227 = vunpack.c.h.b16 %v497
    %v1228 = vunpack.c.l.b16 %v498
    %v1229 = vunpack.c.h.b16 %v498
    %v1230 = vunpack.c.l.b16 %v499
    %v1231 = vunpack.c.h.b16 %v499
    %v1232 = vunpack.c.l.b16 %v500
    %v1233 = vunpack.c.h.b16 %v500
    %v1234 = vunpack.c.l.b16 %v501
    %v1235 = vunpack.c.h.b16 %v501
    %v1236 = vunpack.c.l.b16 %v502
    %v1237 = vunpack.c.h.b16 %v502
    %v1238 = vunpack.c.l.b16 %v503
    %v1239 = vunpack.c.h.b16 %v503
    %v1240 = vunpack.c.l.b16 %v504
    %v1241 = vunpack.c.h.b16 %v504
    %v1242 = vunpack.c.l.b16 %v505
    %v1243 = vunpack.c.h.b16 %v505
    %v1244 = vunpack.c.l.b16 %v506
    %v1245 = vunpack.c.h.b16 %v506
    %v1246 = vunpack.c.l.b16 %v507
    %v1247 = vunpack.c.h.b16 %v507
    %v1248 = vunpack.c.l.b16 %v508
    %v1249 = vunpack.c.h.b16 %v508
    %v1250 = vunpack.c.l.b16 %v509
    %v1251 = vunpack.c.h.b16 %v509
    %v1252 = vunpack.c.l.b16 %v510
    %v1253 = vunpack.c.h.b16 %v510
    %v1254 = vunpack.c.l.b16 %v511
    %v1255 = vunpack.c.h.b16 %v511
    %v1256 = vunpack.c.l.b16 %v512
    %v1257 = vunpack.c.h.b16 %v512
    %v1258 = vunpack.c.l.b16 %v513
    %v1259 = vunpack.c.h.b16 %v513
    %v1260 = vunpack.c.l.b16 %v514
    %v1261 = vunpack.c.h.b16 %v514
    %v1262 = vunpack.c.l.b16 %v515
    %v1263 = vunpack.c.h.b16 %v515
    %v1264 = vunpack.c.l.b16 %v516
    %v1265 = vunpack.c.h.b16 %v516
    %v1266 = vunpack.c.l.b16 %v517
    %v1267 = vunpack.c.h.b16 %v517
    %v1268 = vunpack.c.l.b16 %v518
    %v1269 = vunpack.c.h.b16 %v518
    %v1270 = vunpack.c.l.b16 %v519
    %v1271 = vunpack.c.h.b16 %v519
    %v1272 = vunpack.c.l.b16 %v520
    %v1273 = vunpack.c.h.b16 %v520
    %v1274 = vunpack.c.l.b16 %v521
    %v1275 = vunpack.c.h.b16 %v521
    %v1276 = vunpack.c.l.b16 %v522
    %v1277 = vunpack.c.h.b16 %v522
    %v1278 = vunpack.c.l.b16 %v523
    %v1279 = vunpack.c.h.b16 %v523
    %v1280 = vunpack.c.l.b16 %v524
    %v1281 = vunpack.c.h.b16 %v524
    %v1282 = vunpack.c.l.b16 %v525
    %v1283 = vunpack.c.h.b16 %v525
    %v1284 = vunpack.c.l.b16 %v526
    %v1285 = vunpack.c.h.b16 %v526
    %v1286 = vunpack.c.l.b16 %v527
    %v1287 = vunpack.c.h.b16 %v527
    %v1288 = vunpack.c.l.b16 %v528
    %v1289 = vunpack.c.h.b16 %v528
    %v1290 = vunpack.c.l.b16 %v529
    %v1291 = vunpack.c.h.b16 %v529
    %v1292 = vunpack.c.l.b16 %v530
    %v1293 = vunpack.c.h.b16 %v530
    %v1294 = vunpack.c.l.b16 %v531
    %v1295 = vunpack.c.h.b16 %v531
    %v1296 = vunpack.c.l.b16 %v532
    %v1297 = vunpack.c.h.b16 %v532
    %v1298 = vunpack.c.l.b16 %v533
    %v1299 = vunpack.c.h.b16 %v533
    %v1300 = vunpack.c.l.b16 %v534
    %v1301 = vunpack.c.h.b16 %v534
    %v1302 = vunpack.c.l.b16 %v535
    %v1303 = vunpack.c.h.b16 %v535
    %v1304 = vunpack.c.l.b16 %v536
    %v1305 = vunpack.c.h.b16 %v536
    %v1306 = vunpack.c.l.b16 %v537
    %v1307 = vunpack.c.h.b16 %v537
    %v1308 = vunpack.c.l.b16 %v538
    %v1309 = vunpack.c.h.b16 %v538
    %v1310 = vunpack.c.l.b16 %v539
    %v1311 = vunpack.c.h.b16 %v539
    %v1312 = vunpack.c.l.b16 %v540
    %v1313 = vunpack.c.h.b16 %v540
    %v1314 = vunpack.c.l.b16 %v541
    %v1315 = vunpack.c.h.b16 %v541
    %v1316 = vunpack.c.l.b16 %v542
    %v1317 = vunpack.c.h.b16 %v542
    %v1318 = vunpack.c.l.b16 %v543
    %v1319 = vunpack.c.h.b16 %v543
    %v1320 = vunpack.c.l.b16 %v544
    %v1321 = vunpack.c.h.b16 %v544
    %v1322 = vunpack.c.l.b16 %v545
    %v1323 = vunpack.c.h.b16 %v545
    %v1324 = vpack.c.b16 %v816, %v812
    %v1325 = vpack.c.b16 %v817, %v813
    %v1326 = vpack.c.b16 %v818, %v814
    %v1327 = vpack.c.b16 %v819, %v815
    %v1328 = vpack.c.b16 %v824, %v820
    %v1329 = vpack.c.b16 %v825, %v821
    %v1330 = vpack.c.b16 %v826, %v822
    %v1331 = vpack.c.b16 %v827, %v823
    %v1332 = vpack.c.b16 %v832, %v828
    %v1333 = vpack.c.b16 %v833, %v829
    %v1334 = vpack.c.b16 %v834, %v830
    %v1335 = vpack.c.b16 %v835, %v831
    %v1336 = vpack.c.b16 %v840, %v836
    %v1337 = vpack.c.b16 %v841, %v837
    %v1338 = vpack.c.b16 %v842, %v838
    %v1339 = vpack.c.b16 %v843, %v839
    %v1340 = vpack.c.b16 %v848, %v844
    %v1341 = vpack.c.b16 %v849, %v845
    %v1342 = vpack.c.b16 %v850, %v846
    %v1343 = vpack.c.b16 %v851, %v847
    %v1344 = vpack.c.b16 %v856, %v852
    %v1345 = vpack.c.b16 %v857, %v853
    %v1346 = vpack.c.b16 %v858, %v854
    %v1347 = vpack.c.b16 %v859, %v855
    %v1348 = vpack.c.b16 %v864, %v860
    %v1349 = vpack.c.b16 %v865, %v861
    %v1350 = vpack.c.b16 %v866, %v862
    %v1351 = vpack.c.b16 %v867, %v863
    %v1352 = vpack.c.b16 %v872, %v868
    %v1353 = vpack.c.b16 %v873, %v869
    %v1354 = vpack.c.b16 %v874, %v870
    %v1355 = vpack.c.b16 %v875, %v871
    %v1356 = vpack.c.b16 %v880, %v876
    %v1357 = vpack.c.b16 %v881, %v877
    %v1358 = vpack.c.b16 %v882, %v878
    %v1359 = vpack.c.b16 %v883, %v879
    %v1360 = vpack.c.b16 %v888, %v884
    %v1361 = vpack.c.b16 %v889, %v885
    %v1362 = vpack.c.b16 %v890, %v886
    %v1363 = vpack.c.b16 %v891, %v887
    %v1364 = vpack.c.b16 %v896, %v892
    %v1365 = vpack.c.b16 %v897, %v893
    %v1366 = vpack.c.b16 %v898, %v894
    %v1367 = vpack.c.b16 %v899, %v895
    %v1368 = vpack.c.b16 %v904, %v900
    %v1369 = vpack.c.b16 %v905, %v901
    %v1370 = vpack.c.b16 %v906, %v902
    %v1371 = vpack.c.b16 %v907, %v903
    %v1372 = vpack.c.b16 %v912, %v908
    %v1373 = vpack.c.b16 %v913, %v909
    %v1374 = vpack.c.b16 %v914, %v910
    %v1375 = vpack.c.b16 %v915, %v911
    %v1376 = vpack.c.b16 %v920, %v916
    %v1377 = vpack.c.b16 %v921, %v917
    %v1378 = vpack.c.b16 %v922, %v918
    %v1379 = vpack.c.b16 %v923, %v919
    %v1380 = vpack.c.b16 %v928, %v924
    %v1381 = vpack.c.b16 %v929, %v925
    %v1382 = vpack.c.b16 %v930, %v926
    %v1383 = vpack.c.b16 %v931, %v927
    %v1384 = vpack.c.b16 %v936, %v932
    %v1385 = vpack.c.b16 %v937, %v933
    %v1386 = vpack.c.b16 %v938, %v934
    %v1387 = vpack.c.b16 %v939, %v935
    %v1388 = vpack.c.b16 %v944, %v940
    %v1389 = vpack.c.b16 %v945, %v941
    %v1390 = vpack.c.b16 %v946, %v942
    %v1391 = vpack.c.b16 %v947, %v943
    %v1392 = vpack.c.b16 %v952, %v948
    %v1393 = vpack.c.b16 %v953, %v949
    %v1394 = vpack.c.b16 %v954, %v950
    %v1395 = vpack.c.b16 %v955, %v951
    %v1396 = vpack.c.b16 %v960, %v956
    %v1397 = vpack.c.b16 %v961, %v957
    %v1398 = vpack.c.b16 %v962, %v958
    %v1399 = vpack.c.b16 %v963, %v959
    %v1400 = vpack.c.b16 %v968, %v964
    %v1401 = vpack.c.b16 %v969, %v965
    %v1402 = vpack.c.b16 %v970, %v966
    %v1403 = vpack.c.b16 %v971, %v967
    %v1404 = vpack.c.b16 %v976, %v972
    %v1405 = vpack.c.b16 %v977, %v973
    %v1406 = vpack.c.b16 %v978, %v974
    %v1407 = vpack.c.b16 %v979, %v975
    %v1408 = vpack.c.b16 %v984, %v980
    %v1409 = vpack.c.b16 %v985, %v981
    %v1410 = vpack.c.b16 %v986, %v982
    %v1411 = vpack.c.b16 %v987, %v983
    %v1412 = vpack.c.b16 %v992, %v988
    %v1413 = vpack.c.b16 %v993, %v989
    %v1414 = vpack.c.b16 %v994, %v990
    %v1415 = vpack.c.b16 %v995, %v991
    %v1416 = vpack.c.b16 %v1000, %v996
    %v1417 = vpack.c.b16 %v1001, %v997
    %v1418 = vpack.c.b16 %v1002, %v998
    %v1419 = vpack.c.b16 %v1003, %v999
    %v1420 = vpack.c.b16 %v1008, %v1004
    %v1421 = vpack.c.b16 %v1009, %v1005
    %v1422 = vpack.c.b16 %v1010, %v1006
    %v1423 = vpack.c.b16 %v1011, %v1007
    %v1424 = vpack.c.b16 %v1016, %v1012
    %v1425 = vpack.c.b16 %v1017, %v1013
    %v1426 = vpack.c.b16 %v1018, %v1014
    %v1427 = vpack.c.b16 %v1019, %v1015
    %v1428 = vpack.c.b16 %v1024, %v1020
    %v1429 = vpack.c.b16 %v1025, %v1021
    %v1430 = vpack.c.b16 %v1026, %v1022
    %v1431 = vpack.c.b16 %v1027, %v1023
    %v1432 = vpack.c.b16 %v1032, %v1028
    %v1433 = vpack.c.b16 %v1033, %v1029
    %v1434 = vpack.c.b16 %v1034, %v1030
    %v1435 = vpack.c.b16 %v1035, %v1031
    %v1436 = vpack.c.b16 %v1040, %v1036
    %v1437 = vpack.c.b16 %v1041, %v1037
    %v1438 = vpack.c.b16 %v1042, %v1038
    %v1439 = vpack.c.b16 %v1043, %v1039
    %v1440 = vpack.c.b16 %v1048, %v1044
    %v1441 = vpack.c.b16 %v1049, %v1045
    %v1442 = vpack.c.b16 %v1050, %v1046
    %v1443 = vpack.c.b16 %v1051, %v1047
    %v1444 = vpack.c.b16 %v1056, %v1052
    %v1445 = vpack.c.b16 %v1057, %v1053
    %v1446 = vpack.c.b16 %v1058, %v1054
    %v1447 = vpack.c.b16 %v1059, %v1055
    %v1448 = vpack.c.b16 %v1064, %v1060
    %v1449 = vpack.c.b16 %v1065, %v1061
    %v1450 = vpack.c.b16 %v1066, %v1062
    %v1451 = vpack.c.b16 %v1067, %v1063
    %v1452 = vpack.c.b16 %v1072, %v1068
    %v1453 = vpack.c.b16 %v1073, %v1069
    %v1454 = vpack.c.b16 %v1074, %v1070
    %v1455 = vpack.c.b16 %v1075, %v1071
    %v1456 = vpack.c.b16 %v1080, %v1076
    %v1457 = vpack.c.b16 %v1081, %v1077
    %v1458 = vpack.c.b16 %v1082, %v1078
    %v1459 = vpack.c.b16 %v1083, %v1079
    %v1460 = vpack.c.b16 %v1088, %v1084
    %v1461 = vpack.c.b16 %v1089, %v1085
    %v1462 = vpack.c.b16 %v1090, %v1086
    %v1463 = vpack.c.b16 %v1091, %v1087
    %v1464 = vpack.c.b16 %v1096, %v1092
    %v1465 = vpack.c.b16 %v1097, %v1093
    %v1466 = vpack.c.b16 %v1098, %v1094
    %v1467 = vpack.c.b16 %v1099, %v1095
    %v1468 = vpack.c.b16 %v1104, %v1100
    %v1469 = vpack.c.b16 %v1105, %v1101
    %v1470 = vpack.c.b16 %v1106, %v1102
    %v1471 = vpack.c.b16 %v1107, %v1103
    %v1472 = vpack.c.b16 %v1112, %v1108
    %v1473 = vpack.c.b16 %v1113, %v1109
    %v1474 = vpack.c.b16 %v1114, %v1110
    %v1475 = vpack.c.b16 %v1115, %v1111
    %v1476 = vpack.c.b16 %v1120, %v1116
    %v1477 = vpack.c.b16 %v1121, %v1117
    %v1478 = vpack.c.b16 %v1122, %v1118
    %v1479 = vpack.c.b16 %v1123, %v1119
    %v1480 = vpack.c.b16 %v1128, %v1124
    %v1481 = vpack.c.b16 %v1129, %v1125
    %v1482 = vpack.c.b16 %v1130, %v1126
    %v1483 = vpack.c.b16 %v1131, %v1127
    %v1484 = vpack.c.b16 %v1136, %v1132
    %v1485 = vpack.c.b16 %v1137, %v1133
    %v1486 = vpack.c.b16 %v1138, %v1134
    %v1487 = vpack.c.b16 %v1139, %v1135
    %v1488 = vpack.c.b16 %v1144, %v1140
    %v1489 = vpack.c.b16 %v1145, %v1141
    %v1490 = vpack.c.b16 %v1146, %v1142
    %v1491 = vpack.c.b16 %v1147, %v1143
    %v1492 = vpack.c.b16 %v1152, %v1148
    %v1493 = vpack.c.b16 %v1153, %v1149
    %v1494 = vpack.c.b16 %v1154, %v1150
    %v1495 = vpack.c.b16 %v1155, %v1151
    %v1496 = vpack.c.b16 %v1160, %v1156
    %v1497 = vpack.c.b16 %v1161, %v1157
    %v1498 = vpack.c.b16 %v1162, %v1158
    %v1499 = vpack.c.b16 %v1163, %v1159
    %v1500 = vpack.c.b16 %v1168, %v1164
    %v1501 = vpack.c.b16 %v1169, %v1165
    %v1502 = vpack.c.b16 %v1170, %v1166
    %v1503 = vpack.c.b16 %v1171, %v1167
    %v1504 = vpack.c.b16 %v1176, %v1172
    %v1505 = vpack.c.b16 %v1177, %v1173
    %v1506 = vpack.c.b16 %v1178, %v1174
    %v1507 = vpack.c.b16 %v1179, %v1175
    %v1508 = vpack.c.b16 %v1184, %v1180
    %v1509 = vpack.c.b16 %v1185, %v1181
    %v1510 = vpack.c.b16 %v1186, %v1182
    %v1511 = vpack.c.b16 %v1187, %v1183
    %v1512 = vpack.c.b16 %v1192, %v1188
    %v1513 = vpack.c.b16 %v1193, %v1189
    %v1514 = vpack.c.b16 %v1194, %v1190
    %v1515 = vpack.c.b16 %v1195, %v1191
    %v1516 = vpack.c.b16 %v1200, %v1196
    %v1517 = vpack.c.b16 %v1201, %v1197
    %v1518 = vpack.c.b16 %v1202, %v1198
    %v1519 = vpack.c.b16 %v1203, %v1199
    %v1520 = vpack.c.b16 %v1208, %v1204
    %v1521 = vpack.c.b16 %v1209, %v1205
    %v1522 = vpack.c.b16 %v1210, %v1206
    %v1523 = vpack.c.b16 %v1211, %v1207
    %v1524 = vpack.c.b16 %v1216, %v1212
    %v1525 = vpack.c.b16 %v1217, %v1213
    %v1526 = vpack.c.b16 %v1218, %v1214
    %v1527 = vpack.c.b16 %v1219, %v1215
    %v1528 = vpack.c.b16 %v1224, %v1220
    %v1529 = vpack.c.b16 %v1225, %v1221
    %v1530 = vpack.c.b16 %v1226, %v1222
    %v1531 = vpack.c.b16 %v1227, %v1223
    %v1532 = vpack.c.b16 %v1232, %v1228
    %v1533 = vpack.c.b16 %v1233, %v1229
    %v1534 = vpack.c.b16 %v1234, %v1230
    %v1535 = vpack.c.b16 %v1235, %v1231
    %v1536 = vpack.c.b16 %v1240, %v1236
    %v1537 = vpack.c.b16 %v1241, %v1237
    %v1538 = vpack.c.b16 %v1242, %v1238
    %v1539 = vpack.c.b16 %v1243, %v1239
    %v1540 = vpack.c.b16 %v1248, %v1244
    %v1541 = vpack.c.b16 %v1249, %v1245
    %v1542 = vpack.c.b16 %v1250, %v1246
    %v1543 = vpack.c.b16 %v1251, %v1247
    %v1544 = vpack.c.b16 %v1256, %v1252
    %v1545 = vpack.c.b16 %v1257, %v1253
    %v1546 = vpack.c.b16 %v1258, %v1254
    %v1547 = vpack.c.b16 %v1259, %v1255
    %v1548 = vpack.c.b16 %v1264, %v1260
    %v1549 = vpack.c.b16 %v1265, %v1261
    %v1550 = vpack.c.b16 %v1266, %v1262
    %v1551 = vpack.c.b16 %v1267, %v1263
    %v1552 = vpack.c.b16 %v1272, %v1268
    %v1553 = vpack.c.b16 %v1273, %v1269
    %v1554 = vpack.c.b16 %v1274, %v1270
    %v1555 = vpack.c.b16 %v1275, %v1271
    %v1556 = vpack.c.b16 %v1280, %v1276
    %v1557 = vpack.c.b16 %v1281, %v1277
    %v1558 = vpack.c.b16 %v1282, %v1278
    %v1559 = vpack.c.b16 %v1283, %v1279
    %v1560 = vpack.c.b16 %v1288, %v1284
    %v1561 = vpack.c.b16 %v1289, %v1285
    %v1562 = vpack.c.b16 %v1290, %v1286
    %v1563 = vpack.c.b16 %v1291, %v1287
    %v1564 = vpack.c.b16 %v1296, %v1292
    %v1565 = vpack.c.b16 %v1297, %v1293
    %v1566 = vpack.c.b16 %v1298, %v1294
    %v1567 = vpack.c.b16 %v1299, %v1295
    %v1568 = vpack.c.b16 %v1304, %v1300
    %v1569 = vpack.c.b16 %v1305, %v1301
    %v1570 = vpack.c.b16 %v1306, %v1302
    %v1571 = vpack.c.b16 %v1307, %v1303
    %v1572 = vpack.c.b16 %v1312, %v1308
    %v1573 = vpack.c.b16 %v1313, %v1309
    %v1574 = vpack.c.b16 %v1314, %v1310
    %v1575 = vpack.c.b16 %v1315, %v1311
    %v1576 = vpack.c.b16 %v1320, %v1316
    %v1577 = vpack.c.b16 %v1321, %v1317
    %v1578 = vpack.c.b16 %v1322, %v1318
    %v1579 = vpack.c.b16 %v1323, %v1319
    %1836 = vmatpush.bf16.msra.mxu0 %v1352
    %1837 = vmatpush.bf16.msra.mxu0 %v1348
    %1838 = vmatpush.bf16.msra.mxu0 %v1344
    %1839 = vmatpush.bf16.msra.mxu0 %v1340
    %1840 = vmatpush.bf16.msra.mxu0 %v1336
    %1841 = vmatpush.bf16.msra.mxu0 %v1332
    %1842 = vmatpush.bf16.msra.mxu0 %v1328
    %1843 = vmatpush.bf16.msra.mxu0 %v1324
    %1844 = vmatmul.bf16.gmra.mxu0 %v282
    %v1845 = vpop.f32.mrf.mxu0
    %v1846 = vadd.f32 %v548, %v1845
    %v1847 = vpop.f32.mrf.mxu0
    %1848 = vdwg.mxu0
    %1849 = vmatpush.bf16.msra.mxu0 %v1384
    %1850 = vmatpush.bf16.msra.mxu0 %v1380
    %1851 = vmatpush.bf16.msra.mxu0 %v1376
    %1852 = vmatpush.bf16.msra.mxu0 %v1372
    %1853 = vmatpush.bf16.msra.mxu0 %v1368
    %1854 = vmatpush.bf16.msra.mxu0 %v1364
    %1855 = vmatpush.bf16.msra.mxu0 %v1360
    %1856 = vmatpush.bf16.msra.mxu0 %v1356
    %1857 = vmatmul.bf16.gmra.mxu0 %v283
    %v1858 = vpop.f32.mrf.mxu0
    %v1859 = vadd.f32 %v1846, %v1858
    %v1860 = vpop.f32.mrf.mxu0
    %1861 = vdwg.mxu0
    %1862 = vmatpush.bf16.msra.mxu0 %v1416
    %1863 = vmatpush.bf16.msra.mxu0 %v1412
    %1864 = vmatpush.bf16.msra.mxu0 %v1408
    %1865 = vmatpush.bf16.msra.mxu0 %v1404
    %1866 = vmatpush.bf16.msra.mxu0 %v1400
    %1867 = vmatpush.bf16.msra.mxu0 %v1396
    %1868 = vmatpush.bf16.msra.mxu0 %v1392
    %1869 = vmatpush.bf16.msra.mxu0 %v1388
    %1870 = vmatmul.bf16.gmra.mxu0 %v284
    %v1871 = vpop.f32.mrf.mxu0
    %v1872 = vadd.f32 %v1859, %v1871
    %v1873 = vpop.f32.mrf.mxu0
    %1874 = vdwg.mxu0
    %1875 = vmatpush.bf16.msra.mxu0 %v1448
    %1876 = vmatpush.bf16.msra.mxu0 %v1444
    %1877 = vmatpush.bf16.msra.mxu0 %v1440
    %1878 = vmatpush.bf16.msra.mxu0 %v1436
    %1879 = vmatpush.bf16.msra.mxu0 %v1432
    %1880 = vmatpush.bf16.msra.mxu0 %v1428
    %1881 = vmatpush.bf16.msra.mxu0 %v1424
    %1882 = vmatpush.bf16.msra.mxu0 %v1420
    %1883 = vmatmul.bf16.gmra.mxu0 %v285
    %v1884 = vpop.f32.mrf.mxu0
    %v1885 = vadd.f32 %v1872, %v1884
    %v1886 = vpop.f32.mrf.mxu0
    %1887 = vdwg.mxu0
    %1888 = vmatpush.bf16.msra.mxu0 %v1480
    %1889 = vmatpush.bf16.msra.mxu0 %v1476
    %1890 = vmatpush.bf16.msra.mxu0 %v1472
    %1891 = vmatpush.bf16.msra.mxu0 %v1468
    %1892 = vmatpush.bf16.msra.mxu0 %v1464
    %1893 = vmatpush.bf16.msra.mxu0 %v1460
    %1894 = vmatpush.bf16.msra.mxu0 %v1456
    %1895 = vmatpush.bf16.msra.mxu0 %v1452
    %1896 = vmatmul.bf16.gmra.mxu0 %v286
    %v1897 = vpop.f32.mrf.mxu0
    %v1898 = vadd.f32 %v1885, %v1897
    %v1899 = vpop.f32.mrf.mxu0
    %1900 = vdwg.mxu0
    %1901 = vmatpush.bf16.msra.mxu0 %v1512
    %1902 = vmatpush.bf16.msra.mxu0 %v1508
    %1903 = vmatpush.bf16.msra.mxu0 %v1504
    %1904 = vmatpush.bf16.msra.mxu0 %v1500
    %1905 = vmatpush.bf16.msra.mxu0 %v1496
    %1906 = vmatpush.bf16.msra.mxu0 %v1492
    %1907 = vmatpush.bf16.msra.mxu0 %v1488
    %1908 = vmatpush.bf16.msra.mxu0 %v1484
    %1909 = vmatmul.bf16.gmra.mxu0 %v287
    %v1910 = vpop.f32.mrf.mxu0
    %v1911 = vadd.f32 %v1898, %v1910
    %v1912 = vpop.f32.mrf.mxu0
    %1913 = vdwg.mxu0
    %1914 = vmatpush.bf16.msra.mxu0 %v1544
    %1915 = vmatpush.bf16.msra.mxu0 %v1540
    %1916 = vmatpush.bf16.msra.mxu0 %v1536
    %1917 = vmatpush.bf16.msra.mxu0 %v1532
    %1918 = vmatpush.bf16.msra.mxu0 %v1528
    %1919 = vmatpush.bf16.msra.mxu0 %v1524
    %1920 = vmatpush.bf16.msra.mxu0 %v1520
    %1921 = vmatpush.bf16.msra.mxu0 %v1516
    %1922 = vmatmul.bf16.gmra.mxu0 %v288
    %v1923 = vpop.f32.mrf.mxu0
    %v1924 = vadd.f32 %v1911, %v1923
    %v1925 = vpop.f32.mrf.mxu0
    %1926 = vdwg.mxu0
    %1927 = vmatpush.bf16.msra.mxu0 %v1576
    %1928 = vmatpush.bf16.msra.mxu0 %v1572
    %1929 = vmatpush.bf16.msra.mxu0 %v1568
    %1930 = vmatpush.bf16.msra.mxu0 %v1564
    %1931 = vmatpush.bf16.msra.mxu0 %v1560
    %1932 = vmatpush.bf16.msra.mxu0 %v1556
    %1933 = vmatpush.bf16.msra.mxu0 %v1552
    %1934 = vmatpush.bf16.msra.mxu0 %v1548
    %1935 = vmatmul.bf16.gmra.mxu0 %v289
    %v1936 = vpop.f32.mrf.mxu0
    %v1937 = vadd.f32 %v1924, %v1936
    %v1938 = vpop.f32.mrf.mxu0
    %1939 = vdwg.mxu0
    %1940 = vmatpush.bf16.msra.mxu0 %v1353
    %1941 = vmatpush.bf16.msra.mxu0 %v1349
    %1942 = vmatpush.bf16.msra.mxu0 %v1345
    %1943 = vmatpush.bf16.msra.mxu0 %v1341
    %1944 = vmatpush.bf16.msra.mxu0 %v1337
    %1945 = vmatpush.bf16.msra.mxu0 %v1333
    %1946 = vmatpush.bf16.msra.mxu0 %v1329
    %1947 = vmatpush.bf16.msra.mxu0 %v1325
    %1948 = vmatmul.bf16.gmra.mxu0 %v282
    %v1949 = vpop.f32.mrf.mxu0
    %v1950 = vadd.f32 %v549, %v1949
    %v1951 = vpop.f32.mrf.mxu0
    %1952 = vdwg.mxu0
    %1953 = vmatpush.bf16.msra.mxu0 %v1385
    %1954 = vmatpush.bf16.msra.mxu0 %v1381
    %1955 = vmatpush.bf16.msra.mxu0 %v1377
    %1956 = vmatpush.bf16.msra.mxu0 %v1373
    %1957 = vmatpush.bf16.msra.mxu0 %v1369
    %1958 = vmatpush.bf16.msra.mxu0 %v1365
    %1959 = vmatpush.bf16.msra.mxu0 %v1361
    %1960 = vmatpush.bf16.msra.mxu0 %v1357
    %1961 = vmatmul.bf16.gmra.mxu0 %v283
    %v1962 = vpop.f32.mrf.mxu0
    %v1963 = vadd.f32 %v1950, %v1962
    %v1964 = vpop.f32.mrf.mxu0
    %1965 = vdwg.mxu0
    %1966 = vmatpush.bf16.msra.mxu0 %v1417
    %1967 = vmatpush.bf16.msra.mxu0 %v1413
    %1968 = vmatpush.bf16.msra.mxu0 %v1409
    %1969 = vmatpush.bf16.msra.mxu0 %v1405
    %1970 = vmatpush.bf16.msra.mxu0 %v1401
    %1971 = vmatpush.bf16.msra.mxu0 %v1397
    %1972 = vmatpush.bf16.msra.mxu0 %v1393
    %1973 = vmatpush.bf16.msra.mxu0 %v1389
    %1974 = vmatmul.bf16.gmra.mxu0 %v284
    %v1975 = vpop.f32.mrf.mxu0
    %v1976 = vadd.f32 %v1963, %v1975
    %v1977 = vpop.f32.mrf.mxu0
    %1978 = vdwg.mxu0
    %1979 = vmatpush.bf16.msra.mxu0 %v1449
    %1980 = vmatpush.bf16.msra.mxu0 %v1445
    %1981 = vmatpush.bf16.msra.mxu0 %v1441
    %1982 = vmatpush.bf16.msra.mxu0 %v1437
    %1983 = vmatpush.bf16.msra.mxu0 %v1433
    %1984 = vmatpush.bf16.msra.mxu0 %v1429
    %1985 = vmatpush.bf16.msra.mxu0 %v1425
    %1986 = vmatpush.bf16.msra.mxu0 %v1421
    %1987 = vmatmul.bf16.gmra.mxu0 %v285
    %v1988 = vpop.f32.mrf.mxu0
    %v1989 = vadd.f32 %v1976, %v1988
    %v1990 = vpop.f32.mrf.mxu0
    %1991 = vdwg.mxu0
    %1992 = vmatpush.bf16.msra.mxu0 %v1481
    %1993 = vmatpush.bf16.msra.mxu0 %v1477
    %1994 = vmatpush.bf16.msra.mxu0 %v1473
    %1995 = vmatpush.bf16.msra.mxu0 %v1469
    %1996 = vmatpush.bf16.msra.mxu0 %v1465
    %1997 = vmatpush.bf16.msra.mxu0 %v1461
    %1998 = vmatpush.bf16.msra.mxu0 %v1457
    %1999 = vmatpush.bf16.msra.mxu0 %v1453
    %2000 = vmatmul.bf16.gmra.mxu0 %v286
    %v2001 = vpop.f32.mrf.mxu0
    %v2002 = vadd.f32 %v1989, %v2001
    %v2003 = vpop.f32.mrf.mxu0
    %2004 = vdwg.mxu0
    %2005 = vmatpush.bf16.msra.mxu0 %v1513
    %2006 = vmatpush.bf16.msra.mxu0 %v1509
    %2007 = vmatpush.bf16.msra.mxu0 %v1505
    %2008 = vmatpush.bf16.msra.mxu0 %v1501
    %2009 = vmatpush.bf16.msra.mxu0 %v1497
    %2010 = vmatpush.bf16.msra.mxu0 %v1493
    %2011 = vmatpush.bf16.msra.mxu0 %v1489
    %2012 = vmatpush.bf16.msra.mxu0 %v1485
    %2013 = vmatmul.bf16.gmra.mxu0 %v287
    %v2014 = vpop.f32.mrf.mxu0
    %v2015 = vadd.f32 %v2002, %v2014
    %v2016 = vpop.f32.mrf.mxu0
    %2017 = vdwg.mxu0
    %2018 = vmatpush.bf16.msra.mxu0 %v1545
    %2019 = vmatpush.bf16.msra.mxu0 %v1541
    %2020 = vmatpush.bf16.msra.mxu0 %v1537
    %2021 = vmatpush.bf16.msra.mxu0 %v1533
    %2022 = vmatpush.bf16.msra.mxu0 %v1529
    %2023 = vmatpush.bf16.msra.mxu0 %v1525
    %2024 = vmatpush.bf16.msra.mxu0 %v1521
    %2025 = vmatpush.bf16.msra.mxu0 %v1517
    %2026 = vmatmul.bf16.gmra.mxu0 %v288
    %v2027 = vpop.f32.mrf.mxu0
    %v2028 = vadd.f32 %v2015, %v2027
    %v2029 = vpop.f32.mrf.mxu0
    %2030 = vdwg.mxu0
    %2031 = vmatpush.bf16.msra.mxu0 %v1577
    %2032 = vmatpush.bf16.msra.mxu0 %v1573
    %2033 = vmatpush.bf16.msra.mxu0 %v1569
    %2034 = vmatpush.bf16.msra.mxu0 %v1565
    %2035 = vmatpush.bf16.msra.mxu0 %v1561
    %2036 = vmatpush.bf16.msra.mxu0 %v1557
    %2037 = vmatpush.bf16.msra.mxu0 %v1553
    %2038 = vmatpush.bf16.msra.mxu0 %v1549
    %2039 = vmatmul.bf16.gmra.mxu0 %v289
    %v2040 = vpop.f32.mrf.mxu0
    %v2041 = vadd.f32 %v2028, %v2040
    %v2042 = vpop.f32.mrf.mxu0
    %2043 = vdwg.mxu0
    %2044 = vmatpush.bf16.msra.mxu0 %v1354
    %2045 = vmatpush.bf16.msra.mxu0 %v1350
    %2046 = vmatpush.bf16.msra.mxu0 %v1346
    %2047 = vmatpush.bf16.msra.mxu0 %v1342
    %2048 = vmatpush.bf16.msra.mxu0 %v1338
    %2049 = vmatpush.bf16.msra.mxu0 %v1334
    %2050 = vmatpush.bf16.msra.mxu0 %v1330
    %2051 = vmatpush.bf16.msra.mxu0 %v1326
    %2052 = vmatmul.bf16.gmra.mxu0 %v282
    %v2053 = vpop.f32.mrf.mxu0
    %v2054 = vadd.f32 %v550, %v2053
    %v2055 = vpop.f32.mrf.mxu0
    %2056 = vdwg.mxu0
    %2057 = vmatpush.bf16.msra.mxu0 %v1386
    %2058 = vmatpush.bf16.msra.mxu0 %v1382
    %2059 = vmatpush.bf16.msra.mxu0 %v1378
    %2060 = vmatpush.bf16.msra.mxu0 %v1374
    %2061 = vmatpush.bf16.msra.mxu0 %v1370
    %2062 = vmatpush.bf16.msra.mxu0 %v1366
    %2063 = vmatpush.bf16.msra.mxu0 %v1362
    %2064 = vmatpush.bf16.msra.mxu0 %v1358
    %2065 = vmatmul.bf16.gmra.mxu0 %v283
    %v2066 = vpop.f32.mrf.mxu0
    %v2067 = vadd.f32 %v2054, %v2066
    %v2068 = vpop.f32.mrf.mxu0
    %2069 = vdwg.mxu0
    %2070 = vmatpush.bf16.msra.mxu0 %v1418
    %2071 = vmatpush.bf16.msra.mxu0 %v1414
    %2072 = vmatpush.bf16.msra.mxu0 %v1410
    %2073 = vmatpush.bf16.msra.mxu0 %v1406
    %2074 = vmatpush.bf16.msra.mxu0 %v1402
    %2075 = vmatpush.bf16.msra.mxu0 %v1398
    %2076 = vmatpush.bf16.msra.mxu0 %v1394
    %2077 = vmatpush.bf16.msra.mxu0 %v1390
    %2078 = vmatmul.bf16.gmra.mxu0 %v284
    %v2079 = vpop.f32.mrf.mxu0
    %v2080 = vadd.f32 %v2067, %v2079
    %v2081 = vpop.f32.mrf.mxu0
    %2082 = vdwg.mxu0
    %2083 = vmatpush.bf16.msra.mxu0 %v1450
    %2084 = vmatpush.bf16.msra.mxu0 %v1446
    %2085 = vmatpush.bf16.msra.mxu0 %v1442
    %2086 = vmatpush.bf16.msra.mxu0 %v1438
    %2087 = vmatpush.bf16.msra.mxu0 %v1434
    %2088 = vmatpush.bf16.msra.mxu0 %v1430
    %2089 = vmatpush.bf16.msra.mxu0 %v1426
    %2090 = vmatpush.bf16.msra.mxu0 %v1422
    %2091 = vmatmul.bf16.gmra.mxu0 %v285
    %v2092 = vpop.f32.mrf.mxu0
    %v2093 = vadd.f32 %v2080, %v2092
    %v2094 = vpop.f32.mrf.mxu0
    %2095 = vdwg.mxu0
    %2096 = vmatpush.bf16.msra.mxu0 %v1482
    %2097 = vmatpush.bf16.msra.mxu0 %v1478
    %2098 = vmatpush.bf16.msra.mxu0 %v1474
    %2099 = vmatpush.bf16.msra.mxu0 %v1470
    %2100 = vmatpush.bf16.msra.mxu0 %v1466
    %2101 = vmatpush.bf16.msra.mxu0 %v1462
    %2102 = vmatpush.bf16.msra.mxu0 %v1458
    %2103 = vmatpush.bf16.msra.mxu0 %v1454
    %2104 = vmatmul.bf16.gmra.mxu0 %v286
    %v2105 = vpop.f32.mrf.mxu0
    %v2106 = vadd.f32 %v2093, %v2105
    %v2107 = vpop.f32.mrf.mxu0
    %2108 = vdwg.mxu0
    %2109 = vmatpush.bf16.msra.mxu0 %v1514
    %2110 = vmatpush.bf16.msra.mxu0 %v1510
    %2111 = vmatpush.bf16.msra.mxu0 %v1506
    %2112 = vmatpush.bf16.msra.mxu0 %v1502
    %2113 = vmatpush.bf16.msra.mxu0 %v1498
    %2114 = vmatpush.bf16.msra.mxu0 %v1494
    %2115 = vmatpush.bf16.msra.mxu0 %v1490
    %2116 = vmatpush.bf16.msra.mxu0 %v1486
    %2117 = vmatmul.bf16.gmra.mxu0 %v287
    %v2118 = vpop.f32.mrf.mxu0
    %v2119 = vadd.f32 %v2106, %v2118
    %v2120 = vpop.f32.mrf.mxu0
    %2121 = vdwg.mxu0
    %2122 = vmatpush.bf16.msra.mxu0 %v1546
    %2123 = vmatpush.bf16.msra.mxu0 %v1542
    %2124 = vmatpush.bf16.msra.mxu0 %v1538
    %2125 = vmatpush.bf16.msra.mxu0 %v1534
    %2126 = vmatpush.bf16.msra.mxu0 %v1530
    %2127 = vmatpush.bf16.msra.mxu0 %v1526
    %2128 = vmatpush.bf16.msra.mxu0 %v1522
    %2129 = vmatpush.bf16.msra.mxu0 %v1518
    %2130 = vmatmul.bf16.gmra.mxu0 %v288
    %v2131 = vpop.f32.mrf.mxu0
    %v2132 = vadd.f32 %v2119, %v2131
    %v2133 = vpop.f32.mrf.mxu0
    %2134 = vdwg.mxu0
    %2135 = vmatpush.bf16.msra.mxu0 %v1578
    %2136 = vmatpush.bf16.msra.mxu0 %v1574
    %2137 = vmatpush.bf16.msra.mxu0 %v1570
    %2138 = vmatpush.bf16.msra.mxu0 %v1566
    %2139 = vmatpush.bf16.msra.mxu0 %v1562
    %2140 = vmatpush.bf16.msra.mxu0 %v1558
    %2141 = vmatpush.bf16.msra.mxu0 %v1554
    %2142 = vmatpush.bf16.msra.mxu0 %v1550
    %2143 = vmatmul.bf16.gmra.mxu0 %v289
    %v2144 = vpop.f32.mrf.mxu0
    %v2145 = vadd.f32 %v2132, %v2144
    %v2146 = vpop.f32.mrf.mxu0
    %2147 = vdwg.mxu0
    %2148 = vmatpush.bf16.msra.mxu0 %v1355
    %2149 = vmatpush.bf16.msra.mxu0 %v1351
    %2150 = vmatpush.bf16.msra.mxu0 %v1347
    %2151 = vmatpush.bf16.msra.mxu0 %v1343
    %2152 = vmatpush.bf16.msra.mxu0 %v1339
    %2153 = vmatpush.bf16.msra.mxu0 %v1335
    %2154 = vmatpush.bf16.msra.mxu0 %v1331
    %2155 = vmatpush.bf16.msra.mxu0 %v1327
    %2156 = vmatmul.bf16.gmra.mxu0 %v282
    %v2157 = vpop.f32.mrf.mxu0
    %v2158 = vadd.f32 %v551, %v2157
    %v2159 = vpop.f32.mrf.mxu0
    %2160 = vdwg.mxu0
    %2161 = vmatpush.bf16.msra.mxu0 %v1387
    %2162 = vmatpush.bf16.msra.mxu0 %v1383
    %2163 = vmatpush.bf16.msra.mxu0 %v1379
    %2164 = vmatpush.bf16.msra.mxu0 %v1375
    %2165 = vmatpush.bf16.msra.mxu0 %v1371
    %2166 = vmatpush.bf16.msra.mxu0 %v1367
    %2167 = vmatpush.bf16.msra.mxu0 %v1363
    %2168 = vmatpush.bf16.msra.mxu0 %v1359
    %2169 = vmatmul.bf16.gmra.mxu0 %v283
    %v2170 = vpop.f32.mrf.mxu0
    %v2171 = vadd.f32 %v2158, %v2170
    %v2172 = vpop.f32.mrf.mxu0
    %2173 = vdwg.mxu0
    %2174 = vmatpush.bf16.msra.mxu0 %v1419
    %2175 = vmatpush.bf16.msra.mxu0 %v1415
    %2176 = vmatpush.bf16.msra.mxu0 %v1411
    %2177 = vmatpush.bf16.msra.mxu0 %v1407
    %2178 = vmatpush.bf16.msra.mxu0 %v1403
    %2179 = vmatpush.bf16.msra.mxu0 %v1399
    %2180 = vmatpush.bf16.msra.mxu0 %v1395
    %2181 = vmatpush.bf16.msra.mxu0 %v1391
    %2182 = vmatmul.bf16.gmra.mxu0 %v284
    %v2183 = vpop.f32.mrf.mxu0
    %v2184 = vadd.f32 %v2171, %v2183
    %v2185 = vpop.f32.mrf.mxu0
    %2186 = vdwg.mxu0
    %2187 = vmatpush.bf16.msra.mxu0 %v1451
    %2188 = vmatpush.bf16.msra.mxu0 %v1447
    %2189 = vmatpush.bf16.msra.mxu0 %v1443
    %2190 = vmatpush.bf16.msra.mxu0 %v1439
    %2191 = vmatpush.bf16.msra.mxu0 %v1435
    %2192 = vmatpush.bf16.msra.mxu0 %v1431
    %2193 = vmatpush.bf16.msra.mxu0 %v1427
    %2194 = vmatpush.bf16.msra.mxu0 %v1423
    %2195 = vmatmul.bf16.gmra.mxu0 %v285
    %v2196 = vpop.f32.mrf.mxu0
    %v2197 = vadd.f32 %v2184, %v2196
    %v2198 = vpop.f32.mrf.mxu0
    %2199 = vdwg.mxu0
    %2200 = vmatpush.bf16.msra.mxu0 %v1483
    %2201 = vmatpush.bf16.msra.mxu0 %v1479
    %2202 = vmatpush.bf16.msra.mxu0 %v1475
    %2203 = vmatpush.bf16.msra.mxu0 %v1471
    %2204 = vmatpush.bf16.msra.mxu0 %v1467
    %2205 = vmatpush.bf16.msra.mxu0 %v1463
    %2206 = vmatpush.bf16.msra.mxu0 %v1459
    %2207 = vmatpush.bf16.msra.mxu0 %v1455
    %2208 = vmatmul.bf16.gmra.mxu0 %v286
    %v2209 = vpop.f32.mrf.mxu0
    %v2210 = vadd.f32 %v2197, %v2209
    %v2211 = vpop.f32.mrf.mxu0
    %2212 = vdwg.mxu0
    %2213 = vmatpush.bf16.msra.mxu0 %v1515
    %2214 = vmatpush.bf16.msra.mxu0 %v1511
    %2215 = vmatpush.bf16.msra.mxu0 %v1507
    %2216 = vmatpush.bf16.msra.mxu0 %v1503
    %2217 = vmatpush.bf16.msra.mxu0 %v1499
    %2218 = vmatpush.bf16.msra.mxu0 %v1495
    %2219 = vmatpush.bf16.msra.mxu0 %v1491
    %2220 = vmatpush.bf16.msra.mxu0 %v1487
    %2221 = vmatmul.bf16.gmra.mxu0 %v287
    %v2222 = vpop.f32.mrf.mxu0
    %v2223 = vadd.f32 %v2210, %v2222
    %v2224 = vpop.f32.mrf.mxu0
    %2225 = vdwg.mxu0
    %2226 = vmatpush.bf16.msra.mxu0 %v1547
    %2227 = vmatpush.bf16.msra.mxu0 %v1543
    %2228 = vmatpush.bf16.msra.mxu0 %v1539
    %2229 = vmatpush.bf16.msra.mxu0 %v1535
    %2230 = vmatpush.bf16.msra.mxu0 %v1531
    %2231 = vmatpush.bf16.msra.mxu0 %v1527
    %2232 = vmatpush.bf16.msra.mxu0 %v1523
    %2233 = vmatpush.bf16.msra.mxu0 %v1519
    %2234 = vmatmul.bf16.gmra.mxu0 %v288
    %v2235 = vpop.f32.mrf.mxu0
    %v2236 = vadd.f32 %v2223, %v2235
    %v2237 = vpop.f32.mrf.mxu0
    %2238 = vdwg.mxu0
    %2239 = vmatpush.bf16.msra.mxu0 %v1579
    %2240 = vmatpush.bf16.msra.mxu0 %v1575
    %2241 = vmatpush.bf16.msra.mxu0 %v1571
    %2242 = vmatpush.bf16.msra.mxu0 %v1567
    %2243 = vmatpush.bf16.msra.mxu0 %v1563
    %2244 = vmatpush.bf16.msra.mxu0 %v1559
    %2245 = vmatpush.bf16.msra.mxu0 %v1555
    %2246 = vmatpush.bf16.msra.mxu0 %v1551
    %2247 = vmatmul.bf16.gmra.mxu0 %v289
    %v2248 = vpop.f32.mrf.mxu0
    %v2249 = vadd.f32 %v2236, %v2248
    %v2250 = vpop.f32.mrf.mxu0
    %2251 = vdwg.mxu0
    %v2252 = vmax.f32 %v1937, 0.0
    %v2253 = vmax.f32 %v2041, 0.0
    %v2254 = vmax.f32 %v2145, 0.0
    %v2255 = vmax.f32 %v2249, 0.0
    %v2256 = vpack.c.bf16 %v2252, %v2252
    %v2257 = vpack.c.bf16 %v2253, %v2253
    %v2258 = vpack.c.bf16 %v2254, %v2254
    %v2259 = vpack.c.bf16 %v2255, %v2255
    %v2260 = vld [vmem:[%s5] sm:$0xff]
    %v2261 = vld [vmem:[%s6] sm:$0x1]
    %v2263 = vperm.slane %v2261, 0
    %2266 = vst [vmem:[#allocation1] ss:$4 sm:$0xff] %v2260
    %v2267 = vld.sshfl [vmem:[#allocation1] sm:$0xff pattern:$0x73625140]
    %v2268 = vld.sshfl [vmem:[#allocation1 + $0x8] sm:$0xff pattern:$0x73625140]
    %v2269 = vld.sshfl [vmem:[#allocation1 + $0x10] sm:$0xff pattern:$0x73625140]
    %v2270 = vld.sshfl [vmem:[#allocation1 + $0x18] sm:$0xff pattern:$0x73625140]
    %2275 = vmatpush.bf16.xpose.msra.mxu0 0
    %2276 = vmatpush.bf16.xpose.msra.mxu0 0
    %2277 = vmatpush.bf16.xpose.msra.mxu0 0
    %2278 = vmatpush.bf16.xpose.msra.mxu0 0
    %2279 = vmatpush.bf16.xpose.msra.mxu0 0
    %2280 = vmatpush.bf16.xpose.msra.mxu0 0
    %2281 = vmatpush.bf16.xpose.msra.mxu0 0
    %2282 = vmatpush.bf16.xpose.msra.mxu0 %v2267
    %2283 = vmatmul.bf16.gmra.mxu0 %v2256
    %v2284 = vpop.f32.mrf.mxu0
    %v2285 = vadd.f32 %v2263, %v2284
    %v2286 = vpop.f32.mrf.mxu0
    %2287 = vdwg.mxu0
    %2288 = vmatpush.bf16.xpose.msra.mxu0 0
    %2289 = vmatpush.bf16.xpose.msra.mxu0 0
    %2290 = vmatpush.bf16.xpose.msra.mxu0 0
    %2291 = vmatpush.bf16.xpose.msra.mxu0 0
    %2292 = vmatpush.bf16.xpose.msra.mxu0 0
    %2293 = vmatpush.bf16.xpose.msra.mxu0 0
    %2294 = vmatpush.bf16.xpose.msra.mxu0 0
    %2295 = vmatpush.bf16.xpose.msra.mxu0 %v2268
    %2296 = vmatmul.bf16.gmra.mxu0 %v2257
    %v2297 = vpop.f32.mrf.mxu0
    %v2298 = vadd.f32 %v2285, %v2297
    %v2299 = vpop.f32.mrf.mxu0
    %2300 = vdwg.mxu0
    %2301 = vmatpush.bf16.xpose.msra.mxu0 0
    %2302 = vmatpush.bf16.xpose.msra.mxu0 0
    %2303 = vmatpush.bf16.xpose.msra.mxu0 0
    %2304 = vmatpush.bf16.xpose.msra.mxu0 0
    %2305 = vmatpush.bf16.xpose.msra.mxu0 0
    %2306 = vmatpush.bf16.xpose.msra.mxu0 0
    %2307 = vmatpush.bf16.xpose.msra.mxu0 0
    %2308 = vmatpush.bf16.xpose.msra.mxu0 %v2269
    %2309 = vmatmul.bf16.gmra.mxu0 %v2258
    %v2310 = vpop.f32.mrf.mxu0
    %v2311 = vadd.f32 %v2298, %v2310
    %v2312 = vpop.f32.mrf.mxu0
    %2313 = vdwg.mxu0
    %2314 = vmatpush.bf16.xpose.msra.mxu0 0
    %2315 = vmatpush.bf16.xpose.msra.mxu0 0
    %2316 = vmatpush.bf16.xpose.msra.mxu0 0
    %2317 = vmatpush.bf16.xpose.msra.mxu0 0
    %2318 = vmatpush.bf16.xpose.msra.mxu0 0
    %2319 = vmatpush.bf16.xpose.msra.mxu0 0
    %2320 = vmatpush.bf16.xpose.msra.mxu0 0
    %2321 = vmatpush.bf16.xpose.msra.mxu0 %v2270
    %2322 = vmatmul.bf16.gmra.mxu0 %v2259
    %v2323 = vpop.f32.mrf.mxu0
    %v2324 = vadd.f32 %v2311, %v2323
    %v2325 = vpop.f32.mrf.mxu0
    %2326 = vdwg.mxu0
    %vm2327 = vcmask 15360
    %v2328 = vsel %vm2327, %v2324, 0.0
    %2329 = vadd.xlane.f32.xlu0 %v2328
    %v2330 = vpop.xlane.xlu0 %2329
    %v2331 = vrot.slane %v2330, 4
    %v2332 = vadd.f32 %v2330, %v2331
    %v2333 = vrot.slane %v2332, 2
    %v2334 = vadd.f32 %v2332, %v2333
    %v2335 = vrot.slane %v2334, 1
    %v2336 = vadd.f32 %v2334, %v2335
    %s2337 = vtos %v2336
    %v2338 = vrcp.pop 16.0
    %v2339 = vmul.f32 16.0, %v2338
    %v2340 = vsub.f32 1.0, %v2339
    %v2341 = vmul.f32 %v2338, %v2340
    %v2342 = vadd.f32 %v2338, %v2341
    %vm2343 = vweird.f32 %v2338
    %v2344 = vsel %vm2343, %v2338, %v2342
    %s2345 = vtos %v2344
    %s2346 = smul.f32 %s2337, %s2345
    %2348 = vset.pattern.permute.xlu0 2
    %2349 = vperm.xlu0 %2348, %v2324
    %v2350 = vpop.permute.xlu0 %2349
    %v2352 = vadd.f32 %v2350, %v2324
    %v2353 = vstv %s2346
    %v2354 = vsub.f32 %v2352, %v2353
    %2355 = vst.msk [vmem:[%s7] sm:$0xff] %vm2327, %v2354
    // Predicated region
    $region42: #{tpu_custom_call.1} parent=1 // pred_check
      _
    $region43: #{tpu_custom_call.1} parent=1 // pred_check_branch
      %2357 = sbr.rel (0) target = $region45
    $region44: #{tpu_custom_call.1} parent=1 // pred_region
      _
    $region45: #{tpu_custom_call.1} parent=1 // pred_fallthru
      _
    // Predicated region
    $region46: #{tpu_custom_call.1} parent=1 // pred_check
      _
    $region47: #{tpu_custom_call.1} parent=1 // pred_check_branch
      %2359 = sbr.rel (0) target = $region49
    $region48: #{tpu_custom_call.1} parent=1 // pred_region
      _
    $region49: #{tpu_custom_call.1} parent=1 // pred_fallthru
      _
    %2360 = vsyncpa [#allocation3], 1
    %2361 = vsyncpa [#allocation5], 1

</llo_original>
